<compile_context>
chip_gen: v7x
topology: tpu7x:2x2x1
jax: 0.10.0
libtpu: 0.0.40
codegen_flags: <defaults>
</compile_context>

<pallas_src>
import jax
import jax.numpy as jnp
from jax.experimental import pallas as pl
from jax.experimental.pallas import tpu as pltpu

NEG_SLOPE = 0.01  # default negative_slope of nn.LeakyReLU / F.leaky_relu


def _leaky_relu(x):
    return jnp.where(x > 0, x, NEG_SLOPE * x)


# ---------------------------------------------------------------------------
# Fused kernel: diffusion -> attention -> combine -> 2-layer MLP, all in VMEM
# ---------------------------------------------------------------------------
def gcn_conv_kernel(x_ref, adj_ref, a_ref, w1t_ref, b1_ref, w2t_ref, b2_ref,
                    out_ref):
    # TODO(synk): GCN_diffusion was not provided with the module; this assumes
    # the standard sym-normalized diffusion A_norm = D^-1/2 (A + I) D^-1/2
    # applied 1, 2, 3 times (usual definition in scattering-GCN codebases).
    B, N, F = x_ref.shape
    a_top = a_ref[0:1, :]                       # (1, F) weights for h
    a_bot = a_ref[1:2, :]                       # (1, F) weights for h_Ak

    hA, hA2, hA3, att = [], [], [], []
    for b in range(B):                          # static unroll, B is tiny
        adj_b = adj_ref[b]                      # (N, N)
        x_b = x_ref[b]                          # (N, F)

        deg = jnp.sum(adj_b, axis=1, keepdims=True) + 1.0   # row-sum of A + I
        dinv = jax.lax.rsqrt(deg)               # (N, 1)
        inv_deg = dinv * dinv                   # 1 / deg

        def a_norm_mul(v):
            # D^-1/2 (A + I) D^-1/2 @ v without materializing A_norm or eye.
            return (dinv * jnp.dot(adj_b, dinv * v,
                                   preferred_element_type=jnp.float32)
                    + inv_deg * v)

        s1 = a_norm_mul(x_b)
        s2 = a_norm_mul(s1)
        s3 = a_norm_mul(s2)
        h1, h2, h3 = _leaky_relu(s1), _leaky_relu(s2), _leaky_relu(s3)
        hA.append(h1)
        hA2.append(h2)
        hA3.append(h3)

        # e_k = relu(cat(h, h_Ak)) @ a == relu(h)@a_top + relu(h_Ak)@a_bot,
        # done as VPU multiply-reduce (no 1-wide MXU dots).
        e_h = jnp.sum(jnp.maximum(x_b, 0.0) * a_top, axis=-1, keepdims=True)
        e1 = e_h + jnp.sum(jnp.maximum(h1, 0.0) * a_bot, axis=-1, keepdims=True)
        e2 = e_h + jnp.sum(jnp.maximum(h2, 0.0) * a_bot, axis=-1, keepdims=True)
        e3 = e_h + jnp.sum(jnp.maximum(h3, 0.0) * a_bot, axis=-1, keepdims=True)

        m = jnp.maximum(jnp.maximum(e1, e2), e3)
        x1, x2, x3 = jnp.exp(e1 - m), jnp.exp(e2 - m), jnp.exp(e3 - m)
        inv = 1.0 / (x1 + x2 + x3)              # softmax over the 3 orders
        att.append((x1 * inv, x2 * inv, x3 * inv))

    # Combine: exact torch.cat(dim=0).view(B,3,N,F) semantics — h_all[b, k]
    # is source-matrix (3b+k)//B taken from source-batch (3b+k)%B (mixes
    # batches for B > 1, matching the PyTorch module exactly).
    mats = (hA, hA2, hA3)
    h_prime = []
    for b in range(B):
        acc = None
        for k in range(3):
            c = 3 * b + k
            term = att[b][k] * mats[c // B][c % B]
            acc = term if acc is None else acc + term
        h_prime.append(acc * (1.0 / 3.0))       # mean over the 3 orders

    # 2-layer MLP over all B*N rows stacked (single weight load / MXU pass).
    hp = jnp.concatenate(h_prime, axis=0)                        # (B*N, F)
    y = jnp.dot(hp, w1t_ref[...],
                preferred_element_type=jnp.float32) + b1_ref[...]
    y = _leaky_relu(y)
    y = jnp.dot(y, w2t_ref[...],
                preferred_element_type=jnp.float32) + b2_ref[...]
    y = _leaky_relu(y)

    for b in range(B):
        out_ref[b] = y[b * N:(b + 1) * N, :]


# ---------------------------------------------------------------------------
# Wrapper (reshapes / weight transposes only; no HBM intermediates)
# ---------------------------------------------------------------------------
def gcn_conv_forward(X, adj, a, w1, b1, w2, b2):
    B, N, F = X.shape
    return pl.pallas_call(
        gcn_conv_kernel,
        out_shape=jax.ShapeDtypeStruct((B, N, F), jnp.float32),
        compiler_params=pltpu.CompilerParams(
            vmem_limit_bytes=32 * 1024 * 1024),
    )(X, adj,
      a.reshape(2, F),            # lane-major attention vector: row0=a_top, row1=a_bot
      w1.T, b1.reshape(1, F),
      w2.T, b2.reshape(1, F))


# ---------------------------------------------------------------------------
# Pure-JAX reference (mirrors the PyTorch forward, incl. the dim=0 cat/view)
# ---------------------------------------------------------------------------
def reference_forward(X, adj, a, w1, b1, w2, b2):
    B, N, F = X.shape
    a_hat = adj + jnp.eye(N, dtype=X.dtype)[None]
    deg = jnp.sum(a_hat, axis=2)
    dinv = deg ** -0.5
    a_norm = dinv[:, :, None] * a_hat * dinv[:, None, :]
    s1 = jnp.einsum("bij,bjf->bif", a_norm, X)
    s2 = jnp.einsum("bij,bjf->bif", a_norm, s1)
    s3 = jnp.einsum("bij,bjf->bif", a_norm, s2)
    hA, hA2, hA3 = _leaky_relu(s1), _leaky_relu(s2), _leaky_relu(s3)

    def score(hk):
        ai = jnp.concatenate([X, hk], axis=2)                 # (B, N, 2F)
        return jnp.squeeze(jnp.maximum(ai, 0.0) @ a, -1)      # (B, N)

    e = jnp.stack([score(hA), score(hA2), score(hA3)], axis=1)  # (B, 3, N)
    att = jax.nn.softmax(e, axis=1)[..., None]                  # (B, 3, N, 1)
    h_all = jnp.concatenate([hA, hA2, hA3], axis=0).reshape(B, 3, N, F)
    h_prime = jnp.mean(att * h_all, axis=1)
    y = _leaky_relu(h_prime @ w1.T + b1)
    y = _leaky_relu(y @ w2.T + b2)
    return y


if __name__ == "__main__":
    key = jax.random.PRNGKey(0)
    B, N, H = 2, 16, 32
    kx, kadj, ka, kw1, kb1, kw2, kb2 = jax.random.split(key, 7)

    X = jax.random.normal(kx, (B, N, H), dtype=jnp.float32)
    adj = jax.random.uniform(kadj, (B, N, N), dtype=jnp.float32)
    adj = (adj + jnp.swapaxes(adj, 1, 2)) * 0.5       # symmetric, non-negative

    bound = float(1.0 / (H ** 0.5))
    w1 = jax.random.uniform(kw1, (H, H), jnp.float32, -bound, bound)
    b1 = jax.random.uniform(kb1, (H,), jnp.float32, -bound, bound)
    w2 = jax.random.uniform(kw2, (H, H), jnp.float32, -bound, bound)
    b2 = jax.random.uniform(kb2, (H,), jnp.float32, -bound, bound)
    # The module inits `a` to zeros (softmax would be uniform 1/3); use small
    # deterministic random values instead so the attention path is exercised.
    a = 0.1 * jax.random.normal(ka, (2 * H, 1), dtype=jnp.float32)

    out = gcn_conv_forward(X, adj, a, w1, b1, w2, b2)
    out = jax.block_until_ready(out)

    ref = reference_forward(X, adj, a, w1, b1, w2, b2)
    assert out.shape == (B, N, H), out.shape
    max_err = float(jnp.max(jnp.abs(out - ref)))
    assert jnp.allclose(out, ref, rtol=1e-4, atol=1e-4), max_err
    print("KERNEL_OK")
</pallas_src>

<mosaic_0001>
module attributes {stable_mosaic.version = 11 : i64} {
  func.func @gcn_conv_kernel(%arg0: memref<2x16x32xf32, #tpu.memory_space<vmem>>, %arg1: memref<2x16x16xf32, #tpu.memory_space<vmem>>, %arg2: memref<2x32xf32, #tpu.memory_space<vmem>>, %arg3: memref<32x32xf32, #tpu.memory_space<vmem>>, %arg4: memref<1x32xf32, #tpu.memory_space<vmem>>, %arg5: memref<32x32xf32, #tpu.memory_space<vmem>>, %arg6: memref<1x32xf32, #tpu.memory_space<vmem>>, %arg7: memref<2x16x32xf32, #tpu.memory_space<vmem>>) attributes {dimension_semantics = [], scalar_prefetch = 0 : i64, scratch_operands = 0 : i64, tpu.core_type = #tpu.core_type<tc>} {
    %c0 = arith.constant 0 : index
    %c0_0 = arith.constant 0 : index
    %0 = vector.load %arg2[%c0, %c0_0] : memref<2x32xf32, #tpu.memory_space<vmem>>, vector<1x32xf32>
    %c1 = arith.constant 1 : index
    %c0_1 = arith.constant 0 : index
    %1 = vector.load %arg2[%c1, %c0_1] : memref<2x32xf32, #tpu.memory_space<vmem>>, vector<1x32xf32>
    %c0_2 = arith.constant 0 : index
    %c0_3 = arith.constant 0 : index
    %c0_4 = arith.constant 0 : index
    %2 = vector.load %arg1[%c0_2, %c0_3, %c0_4] : memref<2x16x16xf32, #tpu.memory_space<vmem>>, vector<1x16x16xf32>
    %3 = vector.shape_cast %2 : vector<1x16x16xf32> to vector<16x16xf32>
    %c0_5 = arith.constant 0 : index
    %c0_6 = arith.constant 0 : index
    %c0_7 = arith.constant 0 : index
    %4 = vector.load %arg0[%c0_5, %c0_6, %c0_7] : memref<2x16x32xf32, #tpu.memory_space<vmem>>, vector<1x16x32xf32>
    %5 = vector.shape_cast %4 : vector<1x16x32xf32> to vector<16x32xf32>
    %cst = arith.constant dense<0.000000e+00> : vector<16xf32>
    %6 = vector.multi_reduction <add>, %3, %cst [1] : vector<16x16xf32> to vector<16xf32>
    %7 = vector.shape_cast %6 : vector<16xf32> to vector<16x1xf32>
    %cst_8 = arith.constant 1.000000e+00 : f32
    %8 = vector.broadcast %cst_8 : f32 to vector<16x1xf32>
    %9 = arith.addf %7, %8 : vector<16x1xf32>
    %10 = math.rsqrt %9 : vector<16x1xf32>
    %11 = arith.mulf %10, %10 : vector<16x1xf32>
    %12 = vector.broadcast %10 : vector<16x1xf32> to vector<16x32xf32>
    %13 = arith.mulf %12, %5 : vector<16x32xf32>
    %cst_9 = arith.constant dense<0.000000e+00> : vector<16x32xf32>
    %14 = tpu.matmul %3, %13, %cst_9 {dimension_numbers = #tpu.dot_dimension_numbers<[1], [0], [0], [1], [0, 0, 1, 1], [], []>} : vector<16x16xf32>, vector<16x32xf32>, vector<16x32xf32> -> vector<16x32xf32>
    %15 = vector.broadcast %10 : vector<16x1xf32> to vector<16x32xf32>
    %16 = arith.mulf %15, %14 : vector<16x32xf32>
    %17 = vector.broadcast %11 : vector<16x1xf32> to vector<16x32xf32>
    %18 = arith.mulf %17, %5 : vector<16x32xf32>
    %19 = arith.addf %16, %18 : vector<16x32xf32>
    %20 = vector.broadcast %10 : vector<16x1xf32> to vector<16x32xf32>
    %21 = arith.mulf %20, %19 : vector<16x32xf32>
    %cst_10 = arith.constant dense<0.000000e+00> : vector<16x32xf32>
    %22 = tpu.matmul %3, %21, %cst_10 {dimension_numbers = #tpu.dot_dimension_numbers<[1], [0], [0], [1], [0, 0, 1, 1], [], []>} : vector<16x16xf32>, vector<16x32xf32>, vector<16x32xf32> -> vector<16x32xf32>
    %23 = vector.broadcast %10 : vector<16x1xf32> to vector<16x32xf32>
    %24 = arith.mulf %23, %22 : vector<16x32xf32>
    %25 = vector.broadcast %11 : vector<16x1xf32> to vector<16x32xf32>
    %26 = arith.mulf %25, %19 : vector<16x32xf32>
    %27 = arith.addf %24, %26 : vector<16x32xf32>
    %28 = vector.broadcast %10 : vector<16x1xf32> to vector<16x32xf32>
    %29 = arith.mulf %28, %27 : vector<16x32xf32>
    %cst_11 = arith.constant dense<0.000000e+00> : vector<16x32xf32>
    %30 = tpu.matmul %3, %29, %cst_11 {dimension_numbers = #tpu.dot_dimension_numbers<[1], [0], [0], [1], [0, 0, 1, 1], [], []>} : vector<16x16xf32>, vector<16x32xf32>, vector<16x32xf32> -> vector<16x32xf32>
    %31 = vector.broadcast %10 : vector<16x1xf32> to vector<16x32xf32>
    %32 = arith.mulf %31, %30 : vector<16x32xf32>
    %33 = vector.broadcast %11 : vector<16x1xf32> to vector<16x32xf32>
    %34 = arith.mulf %33, %27 : vector<16x32xf32>
    %35 = arith.addf %32, %34 : vector<16x32xf32>
    %cst_12 = arith.constant 0.000000e+00 : f32
    %36 = vector.broadcast %cst_12 : f32 to vector<16x32xf32>
    %37 = arith.cmpf ogt, %19, %36 : vector<16x32xf32>
    %cst_13 = arith.constant 0.00999999977 : f32
    %38 = vector.broadcast %cst_13 : f32 to vector<16x32xf32>
    %39 = arith.mulf %38, %19 : vector<16x32xf32>
    %40 = arith.select %37, %19, %39 : vector<16x32xi1>, vector<16x32xf32>
    %cst_14 = arith.constant 0.000000e+00 : f32
    %41 = vector.broadcast %cst_14 : f32 to vector<16x32xf32>
    %42 = arith.cmpf ogt, %27, %41 : vector<16x32xf32>
    %cst_15 = arith.constant 0.00999999977 : f32
    %43 = vector.broadcast %cst_15 : f32 to vector<16x32xf32>
    %44 = arith.mulf %43, %27 : vector<16x32xf32>
    %45 = arith.select %42, %27, %44 : vector<16x32xi1>, vector<16x32xf32>
    %cst_16 = arith.constant 0.000000e+00 : f32
    %46 = vector.broadcast %cst_16 : f32 to vector<16x32xf32>
    %47 = arith.cmpf ogt, %35, %46 : vector<16x32xf32>
    %cst_17 = arith.constant 0.00999999977 : f32
    %48 = vector.broadcast %cst_17 : f32 to vector<16x32xf32>
    %49 = arith.mulf %48, %35 : vector<16x32xf32>
    %50 = arith.select %47, %35, %49 : vector<16x32xi1>, vector<16x32xf32>
    %cst_18 = arith.constant 0.000000e+00 : f32
    %51 = vector.broadcast %cst_18 : f32 to vector<16x32xf32>
    %52 = arith.maximumf %5, %51 : vector<16x32xf32>
    %53 = vector.broadcast %0 : vector<1x32xf32> to vector<16x32xf32>
    %54 = arith.mulf %52, %53 : vector<16x32xf32>
    %cst_19 = arith.constant dense<0.000000e+00> : vector<16xf32>
    %55 = vector.multi_reduction <add>, %54, %cst_19 [1] : vector<16x32xf32> to vector<16xf32>
    %56 = vector.shape_cast %55 : vector<16xf32> to vector<16x1xf32>
    %cst_20 = arith.constant 0.000000e+00 : f32
    %57 = vector.broadcast %cst_20 : f32 to vector<16x32xf32>
    %58 = arith.maximumf %40, %57 : vector<16x32xf32>
    %59 = vector.broadcast %1 : vector<1x32xf32> to vector<16x32xf32>
    %60 = arith.mulf %58, %59 : vector<16x32xf32>
    %cst_21 = arith.constant dense<0.000000e+00> : vector<16xf32>
    %61 = vector.multi_reduction <add>, %60, %cst_21 [1] : vector<16x32xf32> to vector<16xf32>
    %62 = vector.shape_cast %61 : vector<16xf32> to vector<16x1xf32>
    %63 = arith.addf %56, %62 : vector<16x1xf32>
    %cst_22 = arith.constant 0.000000e+00 : f32
    %64 = vector.broadcast %cst_22 : f32 to vector<16x32xf32>
    %65 = arith.maximumf %45, %64 : vector<16x32xf32>
    %66 = vector.broadcast %1 : vector<1x32xf32> to vector<16x32xf32>
    %67 = arith.mulf %65, %66 : vector<16x32xf32>
    %cst_23 = arith.constant dense<0.000000e+00> : vector<16xf32>
    %68 = vector.multi_reduction <add>, %67, %cst_23 [1] : vector<16x32xf32> to vector<16xf32>
    %69 = vector.shape_cast %68 : vector<16xf32> to vector<16x1xf32>
    %70 = arith.addf %56, %69 : vector<16x1xf32>
    %cst_24 = arith.constant 0.000000e+00 : f32
    %71 = vector.broadcast %cst_24 : f32 to vector<16x32xf32>
    %72 = arith.maximumf %50, %71 : vector<16x32xf32>
    %73 = vector.broadcast %1 : vector<1x32xf32> to vector<16x32xf32>
    %74 = arith.mulf %72, %73 : vector<16x32xf32>
    %cst_25 = arith.constant dense<0.000000e+00> : vector<16xf32>
    %75 = vector.multi_reduction <add>, %74, %cst_25 [1] : vector<16x32xf32> to vector<16xf32>
    %76 = vector.shape_cast %75 : vector<16xf32> to vector<16x1xf32>
    %77 = arith.addf %56, %76 : vector<16x1xf32>
    %78 = arith.maximumf %63, %70 : vector<16x1xf32>
    %79 = arith.maximumf %78, %77 : vector<16x1xf32>
    %80 = arith.subf %63, %79 : vector<16x1xf32>
    %81 = math.exp %80 : vector<16x1xf32>
    %82 = arith.subf %70, %79 : vector<16x1xf32>
    %83 = math.exp %82 : vector<16x1xf32>
    %84 = arith.subf %77, %79 : vector<16x1xf32>
    %85 = math.exp %84 : vector<16x1xf32>
    %86 = arith.addf %81, %83 : vector<16x1xf32>
    %87 = arith.addf %86, %85 : vector<16x1xf32>
    %cst_26 = arith.constant 1.000000e+00 : f32
    %88 = vector.broadcast %cst_26 : f32 to vector<16x1xf32>
    %89 = arith.divf %88, %87 : vector<16x1xf32>
    %90 = arith.mulf %81, %89 : vector<16x1xf32>
    %91 = arith.mulf %83, %89 : vector<16x1xf32>
    %92 = arith.mulf %85, %89 : vector<16x1xf32>
    %c1_27 = arith.constant 1 : index
    %c0_28 = arith.constant 0 : index
    %c0_29 = arith.constant 0 : index
    %93 = vector.load %arg1[%c1_27, %c0_28, %c0_29] : memref<2x16x16xf32, #tpu.memory_space<vmem>>, vector<1x16x16xf32>
    %94 = vector.shape_cast %93 : vector<1x16x16xf32> to vector<16x16xf32>
    %c1_30 = arith.constant 1 : index
    %c0_31 = arith.constant 0 : index
    %c0_32 = arith.constant 0 : index
    %95 = vector.load %arg0[%c1_30, %c0_31, %c0_32] : memref<2x16x32xf32, #tpu.memory_space<vmem>>, vector<1x16x32xf32>
    %96 = vector.shape_cast %95 : vector<1x16x32xf32> to vector<16x32xf32>
    %cst_33 = arith.constant dense<0.000000e+00> : vector<16xf32>
    %97 = vector.multi_reduction <add>, %94, %cst_33 [1] : vector<16x16xf32> to vector<16xf32>
    %98 = vector.shape_cast %97 : vector<16xf32> to vector<16x1xf32>
    %cst_34 = arith.constant 1.000000e+00 : f32
    %99 = vector.broadcast %cst_34 : f32 to vector<16x1xf32>
    %100 = arith.addf %98, %99 : vector<16x1xf32>
    %101 = math.rsqrt %100 : vector<16x1xf32>
    %102 = arith.mulf %101, %101 : vector<16x1xf32>
    %103 = vector.broadcast %101 : vector<16x1xf32> to vector<16x32xf32>
    %104 = arith.mulf %103, %96 : vector<16x32xf32>
    %cst_35 = arith.constant dense<0.000000e+00> : vector<16x32xf32>
    %105 = tpu.matmul %94, %104, %cst_35 {dimension_numbers = #tpu.dot_dimension_numbers<[1], [0], [0], [1], [0, 0, 1, 1], [], []>} : vector<16x16xf32>, vector<16x32xf32>, vector<16x32xf32> -> vector<16x32xf32>
    %106 = vector.broadcast %101 : vector<16x1xf32> to vector<16x32xf32>
    %107 = arith.mulf %106, %105 : vector<16x32xf32>
    %108 = vector.broadcast %102 : vector<16x1xf32> to vector<16x32xf32>
    %109 = arith.mulf %108, %96 : vector<16x32xf32>
    %110 = arith.addf %107, %109 : vector<16x32xf32>
    %111 = vector.broadcast %101 : vector<16x1xf32> to vector<16x32xf32>
    %112 = arith.mulf %111, %110 : vector<16x32xf32>
    %cst_36 = arith.constant dense<0.000000e+00> : vector<16x32xf32>
    %113 = tpu.matmul %94, %112, %cst_36 {dimension_numbers = #tpu.dot_dimension_numbers<[1], [0], [0], [1], [0, 0, 1, 1], [], []>} : vector<16x16xf32>, vector<16x32xf32>, vector<16x32xf32> -> vector<16x32xf32>
    %114 = vector.broadcast %101 : vector<16x1xf32> to vector<16x32xf32>
    %115 = arith.mulf %114, %113 : vector<16x32xf32>
    %116 = vector.broadcast %102 : vector<16x1xf32> to vector<16x32xf32>
    %117 = arith.mulf %116, %110 : vector<16x32xf32>
    %118 = arith.addf %115, %117 : vector<16x32xf32>
    %119 = vector.broadcast %101 : vector<16x1xf32> to vector<16x32xf32>
    %120 = arith.mulf %119, %118 : vector<16x32xf32>
    %cst_37 = arith.constant dense<0.000000e+00> : vector<16x32xf32>
    %121 = tpu.matmul %94, %120, %cst_37 {dimension_numbers = #tpu.dot_dimension_numbers<[1], [0], [0], [1], [0, 0, 1, 1], [], []>} : vector<16x16xf32>, vector<16x32xf32>, vector<16x32xf32> -> vector<16x32xf32>
    %122 = vector.broadcast %101 : vector<16x1xf32> to vector<16x32xf32>
    %123 = arith.mulf %122, %121 : vector<16x32xf32>
    %124 = vector.broadcast %102 : vector<16x1xf32> to vector<16x32xf32>
    %125 = arith.mulf %124, %118 : vector<16x32xf32>
    %126 = arith.addf %123, %125 : vector<16x32xf32>
    %cst_38 = arith.constant 0.000000e+00 : f32
    %127 = vector.broadcast %cst_38 : f32 to vector<16x32xf32>
    %128 = arith.cmpf ogt, %110, %127 : vector<16x32xf32>
    %cst_39 = arith.constant 0.00999999977 : f32
    %129 = vector.broadcast %cst_39 : f32 to vector<16x32xf32>
    %130 = arith.mulf %129, %110 : vector<16x32xf32>
    %131 = arith.select %128, %110, %130 : vector<16x32xi1>, vector<16x32xf32>
    %cst_40 = arith.constant 0.000000e+00 : f32
    %132 = vector.broadcast %cst_40 : f32 to vector<16x32xf32>
    %133 = arith.cmpf ogt, %118, %132 : vector<16x32xf32>
    %cst_41 = arith.constant 0.00999999977 : f32
    %134 = vector.broadcast %cst_41 : f32 to vector<16x32xf32>
    %135 = arith.mulf %134, %118 : vector<16x32xf32>
    %136 = arith.select %133, %118, %135 : vector<16x32xi1>, vector<16x32xf32>
    %cst_42 = arith.constant 0.000000e+00 : f32
    %137 = vector.broadcast %cst_42 : f32 to vector<16x32xf32>
    %138 = arith.cmpf ogt, %126, %137 : vector<16x32xf32>
    %cst_43 = arith.constant 0.00999999977 : f32
    %139 = vector.broadcast %cst_43 : f32 to vector<16x32xf32>
    %140 = arith.mulf %139, %126 : vector<16x32xf32>
    %141 = arith.select %138, %126, %140 : vector<16x32xi1>, vector<16x32xf32>
    %cst_44 = arith.constant 0.000000e+00 : f32
    %142 = vector.broadcast %cst_44 : f32 to vector<16x32xf32>
    %143 = arith.maximumf %96, %142 : vector<16x32xf32>
    %144 = vector.broadcast %0 : vector<1x32xf32> to vector<16x32xf32>
    %145 = arith.mulf %143, %144 : vector<16x32xf32>
    %cst_45 = arith.constant dense<0.000000e+00> : vector<16xf32>
    %146 = vector.multi_reduction <add>, %145, %cst_45 [1] : vector<16x32xf32> to vector<16xf32>
    %147 = vector.shape_cast %146 : vector<16xf32> to vector<16x1xf32>
    %cst_46 = arith.constant 0.000000e+00 : f32
    %148 = vector.broadcast %cst_46 : f32 to vector<16x32xf32>
    %149 = arith.maximumf %131, %148 : vector<16x32xf32>
    %150 = vector.broadcast %1 : vector<1x32xf32> to vector<16x32xf32>
    %151 = arith.mulf %149, %150 : vector<16x32xf32>
    %cst_47 = arith.constant dense<0.000000e+00> : vector<16xf32>
    %152 = vector.multi_reduction <add>, %151, %cst_47 [1] : vector<16x32xf32> to vector<16xf32>
    %153 = vector.shape_cast %152 : vector<16xf32> to vector<16x1xf32>
    %154 = arith.addf %147, %153 : vector<16x1xf32>
    %cst_48 = arith.constant 0.000000e+00 : f32
    %155 = vector.broadcast %cst_48 : f32 to vector<16x32xf32>
    %156 = arith.maximumf %136, %155 : vector<16x32xf32>
    %157 = vector.broadcast %1 : vector<1x32xf32> to vector<16x32xf32>
    %158 = arith.mulf %156, %157 : vector<16x32xf32>
    %cst_49 = arith.constant dense<0.000000e+00> : vector<16xf32>
    %159 = vector.multi_reduction <add>, %158, %cst_49 [1] : vector<16x32xf32> to vector<16xf32>
    %160 = vector.shape_cast %159 : vector<16xf32> to vector<16x1xf32>
    %161 = arith.addf %147, %160 : vector<16x1xf32>
    %cst_50 = arith.constant 0.000000e+00 : f32
    %162 = vector.broadcast %cst_50 : f32 to vector<16x32xf32>
    %163 = arith.maximumf %141, %162 : vector<16x32xf32>
    %164 = vector.broadcast %1 : vector<1x32xf32> to vector<16x32xf32>
    %165 = arith.mulf %163, %164 : vector<16x32xf32>
    %cst_51 = arith.constant dense<0.000000e+00> : vector<16xf32>
    %166 = vector.multi_reduction <add>, %165, %cst_51 [1] : vector<16x32xf32> to vector<16xf32>
    %167 = vector.shape_cast %166 : vector<16xf32> to vector<16x1xf32>
    %168 = arith.addf %147, %167 : vector<16x1xf32>
    %169 = arith.maximumf %154, %161 : vector<16x1xf32>
    %170 = arith.maximumf %169, %168 : vector<16x1xf32>
    %171 = arith.subf %154, %170 : vector<16x1xf32>
    %172 = math.exp %171 : vector<16x1xf32>
    %173 = arith.subf %161, %170 : vector<16x1xf32>
    %174 = math.exp %173 : vector<16x1xf32>
    %175 = arith.subf %168, %170 : vector<16x1xf32>
    %176 = math.exp %175 : vector<16x1xf32>
    %177 = arith.addf %172, %174 : vector<16x1xf32>
    %178 = arith.addf %177, %176 : vector<16x1xf32>
    %cst_52 = arith.constant 1.000000e+00 : f32
    %179 = vector.broadcast %cst_52 : f32 to vector<16x1xf32>
    %180 = arith.divf %179, %178 : vector<16x1xf32>
    %181 = arith.mulf %172, %180 : vector<16x1xf32>
    %182 = arith.mulf %174, %180 : vector<16x1xf32>
    %183 = arith.mulf %176, %180 : vector<16x1xf32>
    %184 = vector.broadcast %90 : vector<16x1xf32> to vector<16x32xf32>
    %185 = arith.mulf %184, %40 : vector<16x32xf32>
    %186 = vector.broadcast %91 : vector<16x1xf32> to vector<16x32xf32>
    %187 = arith.mulf %186, %131 : vector<16x32xf32>
    %188 = arith.addf %185, %187 : vector<16x32xf32>
    %189 = vector.broadcast %92 : vector<16x1xf32> to vector<16x32xf32>
    %190 = arith.mulf %189, %45 : vector<16x32xf32>
    %191 = arith.addf %188, %190 : vector<16x32xf32>
    %cst_53 = arith.constant 0.333333343 : f32
    %192 = vector.broadcast %cst_53 : f32 to vector<16x32xf32>
    %193 = arith.mulf %191, %192 : vector<16x32xf32>
    %194 = vector.broadcast %181 : vector<16x1xf32> to vector<16x32xf32>
    %195 = arith.mulf %194, %136 : vector<16x32xf32>
    %196 = vector.broadcast %182 : vector<16x1xf32> to vector<16x32xf32>
    %197 = arith.mulf %196, %50 : vector<16x32xf32>
    %198 = arith.addf %195, %197 : vector<16x32xf32>
    %199 = vector.broadcast %183 : vector<16x1xf32> to vector<16x32xf32>
    %200 = arith.mulf %199, %141 : vector<16x32xf32>
    %201 = arith.addf %198, %200 : vector<16x32xf32>
    %cst_54 = arith.constant 0.333333343 : f32
    %202 = vector.broadcast %cst_54 : f32 to vector<16x32xf32>
    %203 = arith.mulf %201, %202 : vector<16x32xf32>
    %204 = tpu.concatenate %193, %203 in 0 : vector<16x32xf32>, vector<16x32xf32> -> vector<32x32xf32>
    %c0_55 = arith.constant 0 : index
    %c0_56 = arith.constant 0 : index
    %205 = vector.load %arg3[%c0_55, %c0_56] : memref<32x32xf32, #tpu.memory_space<vmem>>, vector<32x32xf32>
    %cst_57 = arith.constant dense<0.000000e+00> : vector<32x32xf32>
    %206 = tpu.matmul %204, %205, %cst_57 {dimension_numbers = #tpu.dot_dimension_numbers<[1], [0], [0], [1], [0, 0, 1, 1], [], []>} : vector<32x32xf32>, vector<32x32xf32>, vector<32x32xf32> -> vector<32x32xf32>
    %c0_58 = arith.constant 0 : index
    %c0_59 = arith.constant 0 : index
    %207 = vector.load %arg4[%c0_58, %c0_59] : memref<1x32xf32, #tpu.memory_space<vmem>>, vector<1x32xf32>
    %208 = vector.broadcast %207 : vector<1x32xf32> to vector<32x32xf32>
    %209 = arith.addf %206, %208 : vector<32x32xf32>
    %cst_60 = arith.constant 0.000000e+00 : f32
    %210 = vector.broadcast %cst_60 : f32 to vector<32x32xf32>
    %211 = arith.cmpf ogt, %209, %210 : vector<32x32xf32>
    %cst_61 = arith.constant 0.00999999977 : f32
    %212 = vector.broadcast %cst_61 : f32 to vector<32x32xf32>
    %213 = arith.mulf %212, %209 : vector<32x32xf32>
    %214 = arith.select %211, %209, %213 : vector<32x32xi1>, vector<32x32xf32>
    %c0_62 = arith.constant 0 : index
    %c0_63 = arith.constant 0 : index
    %215 = vector.load %arg5[%c0_62, %c0_63] : memref<32x32xf32, #tpu.memory_space<vmem>>, vector<32x32xf32>
    %cst_64 = arith.constant dense<0.000000e+00> : vector<32x32xf32>
    %216 = tpu.matmul %214, %215, %cst_64 {dimension_numbers = #tpu.dot_dimension_numbers<[1], [0], [0], [1], [0, 0, 1, 1], [], []>} : vector<32x32xf32>, vector<32x32xf32>, vector<32x32xf32> -> vector<32x32xf32>
    %c0_65 = arith.constant 0 : index
    %c0_66 = arith.constant 0 : index
    %217 = vector.load %arg6[%c0_65, %c0_66] : memref<1x32xf32, #tpu.memory_space<vmem>>, vector<1x32xf32>
    %218 = vector.broadcast %217 : vector<1x32xf32> to vector<32x32xf32>
    %219 = arith.addf %216, %218 : vector<32x32xf32>
    %cst_67 = arith.constant 0.000000e+00 : f32
    %220 = vector.broadcast %cst_67 : f32 to vector<32x32xf32>
    %221 = arith.cmpf ogt, %219, %220 : vector<32x32xf32>
    %cst_68 = arith.constant 0.00999999977 : f32
    %222 = vector.broadcast %cst_68 : f32 to vector<32x32xf32>
    %223 = arith.mulf %222, %219 : vector<32x32xf32>
    %224 = arith.select %221, %219, %223 : vector<32x32xi1>, vector<32x32xf32>
    %225 = vector.extract_strided_slice %224 {offsets = [0, 0], sizes = [16, 32], strides = [1, 1]} : vector<32x32xf32> to vector<16x32xf32>
    %c0_69 = arith.constant 0 : index
    %c0_70 = arith.constant 0 : index
    %c0_71 = arith.constant 0 : index
    %226 = vector.load %arg7[%c0_69, %c0_70, %c0_71] : memref<2x16x32xf32, #tpu.memory_space<vmem>>, vector<1x16x32xf32>
    %227 = vector.shape_cast %226 : vector<1x16x32xf32> to vector<16x32xf32>
    %228 = vector.shape_cast %225 : vector<16x32xf32> to vector<1x16x32xf32>
    tpu.vector_store %arg7[%c0_69, %c0_70, %c0_71], %228 {strides = array<i32>} : memref<2x16x32xf32, #tpu.memory_space<vmem>>, vector<1x16x32xf32>,
    %229 = vector.extract_strided_slice %224 {offsets = [16, 0], sizes = [16, 32], strides = [1, 1]} : vector<32x32xf32> to vector<16x32xf32>
    %c1_72 = arith.constant 1 : index
    %c0_73 = arith.constant 0 : index
    %c0_74 = arith.constant 0 : index
    %230 = vector.load %arg7[%c1_72, %c0_73, %c0_74] : memref<2x16x32xf32, #tpu.memory_space<vmem>>, vector<1x16x32xf32>
    %231 = vector.shape_cast %230 : vector<1x16x32xf32> to vector<16x32xf32>
    %232 = vector.shape_cast %229 : vector<16x32xf32> to vector<1x16x32xf32>
    tpu.vector_store %arg7[%c1_72, %c0_73, %c0_74], %232 {strides = array<i32>} : memref<2x16x32xf32, #tpu.memory_space<vmem>>, vector<1x16x32xf32>,
    return
  }
}

</mosaic_0001>

<llo_original>
// kernel: tpu_custom_call.1
$region0: #{tpu_custom_call.1}
  #allocation0 [shape = 'u32[]', space=smem, size = 0x4, offset = 0x4, fixed_abs, tag = 'smem constant byte address 0x4 - core index']
  #allocation1 [shape = 'u32[144,128]{1,0:T(1,128)}', space=vmem, size = 0x12000, scoped, tag = 'internal scratch']
  %s0 = inlined_call_operand.hbm [shape: f32[2,16,32], index: 0, kind: input, shape index: {}]
  %s1 = inlined_call_operand.hbm [shape: f32[2,16,16], index: 1, kind: input, shape index: {}]
  %s2 = inlined_call_operand.vmem [shape: f32[2,32], index: 2, kind: input, shape index: {}]
  %s3 = inlined_call_operand.hbm [shape: f32[32,32], index: 3, kind: input, shape index: {}]
  %s4 = inlined_call_operand.vmem [shape: f32[1,32], index: 4, kind: input, shape index: {}]
  %s5 = inlined_call_operand.hbm [shape: f32[32,32], index: 5, kind: input, shape index: {}]
  %s6 = inlined_call_operand.vmem [shape: f32[1,32], index: 6, kind: input, shape index: {}]
  %s7 = inlined_call_operand.hbm [shape: f32[2,16,32], index: 7, kind: output, shape index: {}]
  %s8 = sld [smem:[#allocation0]]
  $region54: #{tpu_custom_call.1} parent=0
    _
  %s10 = ssub.s32 1, %s8
  %s11 = scalar_select 0, %s10, %s8
  $region1: #{tpu_custom_call.1} parent=0
    #allocation2 [shape = 'u8[16384]{0}', space=vmem, size = 0x4000, scoped, tag = 'input window, operand 0, single buffered']
    #allocation3 [shape = 's32[1]{0}', space=sflag, size = 0x4, scoped, tag = 'scoped memory for tpu_custom_call.1']
    #allocation4 [shape = 's32[1]{0}', space=sflag, size = 0x4, scoped, tag = 'scoped memory for tpu_custom_call.1']
    #allocation5 [shape = 'u8[16384]{0}', space=vmem, size = 0x4000, scoped, tag = 'input window, operand 1, single buffered']
    #allocation6 [shape = 's32[1]{0}', space=sflag, size = 0x4, scoped, tag = 'scoped memory for tpu_custom_call.1']
    #allocation7 [shape = 'u8[16384]{0}', space=vmem, size = 0x4000, scoped, tag = 'input window, operand 3, single buffered']
    #allocation8 [shape = 'u8[16384]{0}', space=vmem, size = 0x4000, scoped, tag = 'input window, operand 5, single buffered']
    #allocation9 [shape = 's32[1]{0}', space=sflag, size = 0x4, scoped, tag = 'scoped memory for tpu_custom_call.1']
    #allocation10 [shape = 'u8[16384]{0}', space=vmem, size = 0x4000, scoped, tag = 'output window, operand 0, single buffered']
    %12 = vsyncpa [#allocation3], 0
    %13 = vsyncpa [#allocation6], 0
    %14 = vsyncpa [#allocation9], 0
    %15 = vsyncpa [#allocation4], 0
    // Predicated region
    $region2: #{tpu_custom_call.1} parent=1 // pred_check
      _
    $region3: #{tpu_custom_call.1} parent=1 // pred_check_branch
      %17 = sbr.rel (0) target = $region5
    $region4: #{tpu_custom_call.1} parent=1 // pred_region
      %s19 = ssub.s32 512, 512
      %20 = vsyncadd [#allocation3], %s19
      %s21 = sshll.u32 [#allocation2], 4
      %s22 = int_to_ptr.vmem [resolvable:$true] %s21
      %27 = dma.hbm_to_vmem [thread:$0]  %s0, 512, %s22, [#allocation3], 128, 128, 8
    $region5: #{tpu_custom_call.1} parent=1 // pred_fallthru
      _
    // Predicated region
    $region6: #{tpu_custom_call.1} parent=1 // pred_check
      _
    $region7: #{tpu_custom_call.1} parent=1 // pred_check_branch
      %29 = sbr.rel (0) target = $region9
    $region8: #{tpu_custom_call.1} parent=1 // pred_region
      %s31 = ssub.s32 512, 512
      %32 = vsyncadd [#allocation6], %s31
      %s33 = sshll.u32 [#allocation5], 4
      %s34 = int_to_ptr.vmem [resolvable:$true] %s33
      %39 = dma.hbm_to_vmem [thread:$0]  %s1, 512, %s34, [#allocation6], 128, 128, 8
    $region9: #{tpu_custom_call.1} parent=1 // pred_fallthru
      _
    // Predicated region
    $region10: #{tpu_custom_call.1} parent=1 // pred_check
      _
    $region11: #{tpu_custom_call.1} parent=1 // pred_check_branch
      %41 = sbr.rel (0) target = $region13
    $region12: #{tpu_custom_call.1} parent=1 // pred_region
      _
    $region13: #{tpu_custom_call.1} parent=1 // pred_fallthru
      _
    // Predicated region
    $region14: #{tpu_custom_call.1} parent=1 // pred_check
      _
    $region15: #{tpu_custom_call.1} parent=1 // pred_check_branch
      %43 = sbr.rel (0) target = $region17
    $region16: #{tpu_custom_call.1} parent=1 // pred_region
      %s45 = ssub.s32 512, 512
      %46 = vsyncadd [#allocation6], %s45
      %s47 = sshll.u32 [#allocation7], 4
      %s48 = int_to_ptr.vmem [resolvable:$true] %s47
      %53 = dma.hbm_to_vmem [thread:$0]  %s3, 512, %s48, [#allocation6], 128, 128, 8
    $region17: #{tpu_custom_call.1} parent=1 // pred_fallthru
      _
    // Predicated region
    $region18: #{tpu_custom_call.1} parent=1 // pred_check
      _
    $region19: #{tpu_custom_call.1} parent=1 // pred_check_branch
      %55 = sbr.rel (0) target = $region21
    $region20: #{tpu_custom_call.1} parent=1 // pred_region
      _
    $region21: #{tpu_custom_call.1} parent=1 // pred_fallthru
      _
    // Predicated region
    $region22: #{tpu_custom_call.1} parent=1 // pred_check
      _
    $region23: #{tpu_custom_call.1} parent=1 // pred_check_branch
      %57 = sbr.rel (0) target = $region25
    $region24: #{tpu_custom_call.1} parent=1 // pred_region
      %s59 = ssub.s32 512, 512
      %60 = vsyncadd [#allocation9], %s59
      %s61 = sshll.u32 [#allocation8], 4
      %s62 = int_to_ptr.vmem [resolvable:$true] %s61
      %67 = dma.hbm_to_vmem [thread:$0]  %s5, 512, %s62, [#allocation9], 128, 128, 8
    $region25: #{tpu_custom_call.1} parent=1 // pred_fallthru
      _
    // Predicated region
    $region26: #{tpu_custom_call.1} parent=1 // pred_check
      _
    $region27: #{tpu_custom_call.1} parent=1 // pred_check_branch
      %69 = sbr.rel (0) target = $region29
    $region28: #{tpu_custom_call.1} parent=1 // pred_region
      _
    $region29: #{tpu_custom_call.1} parent=1 // pred_fallthru
      _
    // Predicated region
    $region30: #{tpu_custom_call.1} parent=1 // pred_check
      _
    $region31: #{tpu_custom_call.1} parent=1 // pred_check_branch
      %71 = sbr.rel (0) target = $region33
    $region32: #{tpu_custom_call.1} parent=1 // pred_region
      %72 = dma.done [#allocation3], 512
    $region33: #{tpu_custom_call.1} parent=1 // pred_fallthru
      _
    // Predicated region
    $region34: #{tpu_custom_call.1} parent=1 // pred_check
      _
    $region35: #{tpu_custom_call.1} parent=1 // pred_check_branch
      %74 = sbr.rel (0) target = $region37
    $region36: #{tpu_custom_call.1} parent=1 // pred_region
      %75 = dma.done [#allocation6], 512
    $region37: #{tpu_custom_call.1} parent=1 // pred_fallthru
      _
    // Predicated region
    $region38: #{tpu_custom_call.1} parent=1 // pred_check
      _
    $region39: #{tpu_custom_call.1} parent=1 // pred_check_branch
      %77 = sbr.rel (0) target = $region41
    $region40: #{tpu_custom_call.1} parent=1 // pred_region
      %78 = dma.done [#allocation6], 512
    $region41: #{tpu_custom_call.1} parent=1 // pred_fallthru
      _
    // Predicated region
    $region42: #{tpu_custom_call.1} parent=1 // pred_check
      _
    $region43: #{tpu_custom_call.1} parent=1 // pred_check_branch
      %80 = sbr.rel (0) target = $region45
    $region44: #{tpu_custom_call.1} parent=1 // pred_region
      %81 = dma.done [#allocation9], 512
    $region45: #{tpu_custom_call.1} parent=1 // pred_fallthru
      _
    %v82 = vld [vmem:[%s2] sm:$0x1]
    %v83 = vld [vmem:[%s2 + $0x1] sm:$0x1]
    %v84 = vld [vmem:[#allocation5] sm:$0xff]
    %v85 = vld [vmem:[#allocation5 + $0x8] sm:$0xff]
    %v86 = vld [vmem:[#allocation2] sm:$0xff]
    %v87 = vld [vmem:[#allocation2 + $0x8] sm:$0xff]
    %vm88 = vcmask 130048
    %v89 = vsel %vm88, %v84, 0.0
    %90 = vadd.xlane.f32.xlu0 %v89
    %v91 = vpop.xlane.xlu0 %90
    %v92 = vsel %vm88, %v85, 0.0
    %93 = vadd.xlane.f32.xlu0 %v92
    %v94 = vpop.xlane.xlu0 %93
    %v95 = vadd.f32 %v91, 1.0
    %v96 = vadd.f32 %v94, 1.0
    %v97 = vrsqrt.pop %v95
    %v98 = vrsqrt.pop %v96
    %v99 = vmul.f32 %v97, %v97
    %v100 = vmul.f32 %v98, %v98
    %v101 = vmul.f32 %v97, %v86
    %v102 = vmul.f32 %v98, %v87
    %v104 = vsel %vm88, %v84, 0
    %v107 = vsel %vm88, %v85, 0
    %109 = vmatprep.subr.mxu0 0.0
    %110 = vmatpush1.msra.mxu0 %v101
    %111 = vmatprep.subr.mxu0 0.0
    %112 = vmatpush1.msra.mxu0 %v102
    %113 = vmatprep.subr.mxu0 0.0
    %114 = vmatpush1.msra.mxu0 0.0
    %115 = vmatprep.subr.mxu0 0.0
    %116 = vmatpush1.msra.mxu0 0.0
    %117 = vmatprep.subr.mxu0 0.0
    %118 = vmatpush1.msra.mxu0 0.0
    %119 = vmatprep.subr.mxu0 0.0
    %120 = vmatpush1.msra.mxu0 0.0
    %121 = vmatprep.subr.mxu0 0.0
    %122 = vmatpush1.msra.mxu0 0.0
    %123 = vmatprep.subr.mxu0 0.0
    %124 = vmatpush1.msra.mxu0 0.0
    %125 = vmatprep.subr.mxu0 0.0
    %126 = vmatpush1.msra.mxu0 0.0
    %127 = vmatprep.subr.mxu0 0.0
    %128 = vmatpush1.msra.mxu0 0.0
    %129 = vmatprep.subr.mxu0 0.0
    %130 = vmatpush1.msra.mxu0 0.0
    %131 = vmatprep.subr.mxu0 0.0
    %132 = vmatpush1.msra.mxu0 0.0
    %133 = vmatprep.subr.mxu0 0.0
    %134 = vmatpush1.msra.mxu0 0.0
    %135 = vmatprep.subr.mxu0 0.0
    %136 = vmatpush1.msra.mxu0 0.0
    %137 = vmatprep.subr.mxu0 0.0
    %138 = vmatpush1.msra.mxu0 0.0
    %139 = vmatprep.subr.mxu0 0.0
    %140 = vmatpush1.msra.mxu0 0.0
    %141 = vmatprep.subr.mxu0 0.0
    %142 = vmatpush1.msra.mxu0 0.0
    %143 = vmatprep.subr.mxu0 0.0
    %144 = vmatpush1.msra.mxu0 0.0
    %145 = vmatprep.subr.mxu0 0.0
    %146 = vmatpush1.msra.mxu0 0.0
    %147 = vmatprep.subr.mxu0 0.0
    %148 = vmatpush1.msra.mxu0 0.0
    %149 = vmatprep.subr.mxu0 0.0
    %150 = vmatpush1.msra.mxu0 0.0
    %151 = vmatprep.subr.mxu0 0.0
    %152 = vmatpush1.msra.mxu0 0.0
    %153 = vmatprep.subr.mxu0 0.0
    %154 = vmatpush1.msra.mxu0 0.0
    %155 = vmatprep.subr.mxu0 0.0
    %156 = vmatpush1.msra.mxu0 0.0
    %157 = vmatprep.subr.mxu0 0.0
    %158 = vmatpush1.msra.mxu0 0.0
    %159 = vmatprep.subr.mxu0 0.0
    %160 = vmatpush1.msra.mxu0 0.0
    %161 = vmatprep.subr.mxu0 0.0
    %162 = vmatpush1.msra.mxu0 0.0
    %163 = vmatprep.subr.mxu0 0.0
    %164 = vmatpush1.msra.mxu0 0.0
    %165 = vmatprep.subr.mxu0 0.0
    %166 = vmatpush1.msra.mxu0 0.0
    %167 = vmatprep.subr.mxu0 0.0
    %168 = vmatpush1.msra.mxu0 0.0
    %169 = vmatprep.subr.mxu0 0.0
    %170 = vmatpush1.msra.mxu0 0.0
    %171 = vmatprep.subr.mxu0 0.0
    %172 = vmatpush1.msra.mxu0 0.0
    %173 = vmatprep.mubr.f32.mxu0 0.0
    %174 = vmatmul.mubr.f32.gmra.mrb[0].mxu0 %v104
    %v175 = vpop.f32.mrb[0].mxu0
    %v176 = vadd.f32 0.0, %v175
    %v177 = vpop.f32.mrb[0].mxu0
    %178 = vmatprep.mubr.f32.mxu0 0.0
    %179 = vmatmul.mubr.f32.gmra.mrb[0].mxu0 %v107
    %v180 = vpop.f32.mrb[0].mxu0
    %v181 = vadd.f32 0.0, %v180
    %v182 = vpop.f32.mrb[0].mxu0
    %183 = vdwg.mxu0
    %v184 = vmul.f32 %v97, %v176
    %v185 = vmul.f32 %v98, %v181
    %v186 = vmul.f32 %v99, %v86
    %v187 = vmul.f32 %v100, %v87
    %v188 = vadd.f32 %v184, %v186
    %v189 = vadd.f32 %v185, %v187
    %v190 = vmul.f32 %v97, %v188
    %v191 = vmul.f32 %v98, %v189
    %192 = vmatprep.subr.mxu0 0.0
    %193 = vmatpush1.msra.mxu0 %v190
    %194 = vmatprep.subr.mxu0 0.0
    %195 = vmatpush1.msra.mxu0 %v191
    %196 = vmatprep.subr.mxu0 0.0
    %197 = vmatpush1.msra.mxu0 0.0
    %198 = vmatprep.subr.mxu0 0.0
    %199 = vmatpush1.msra.mxu0 0.0
    %200 = vmatprep.subr.mxu0 0.0
    %201 = vmatpush1.msra.mxu0 0.0
    %202 = vmatprep.subr.mxu0 0.0
    %203 = vmatpush1.msra.mxu0 0.0
    %204 = vmatprep.subr.mxu0 0.0
    %205 = vmatpush1.msra.mxu0 0.0
    %206 = vmatprep.subr.mxu0 0.0
    %207 = vmatpush1.msra.mxu0 0.0
    %208 = vmatprep.subr.mxu0 0.0
    %209 = vmatpush1.msra.mxu0 0.0
    %210 = vmatprep.subr.mxu0 0.0
    %211 = vmatpush1.msra.mxu0 0.0
    %212 = vmatprep.subr.mxu0 0.0
    %213 = vmatpush1.msra.mxu0 0.0
    %214 = vmatprep.subr.mxu0 0.0
    %215 = vmatpush1.msra.mxu0 0.0
    %216 = vmatprep.subr.mxu0 0.0
    %217 = vmatpush1.msra.mxu0 0.0
    %218 = vmatprep.subr.mxu0 0.0
    %219 = vmatpush1.msra.mxu0 0.0
    %220 = vmatprep.subr.mxu0 0.0
    %221 = vmatpush1.msra.mxu0 0.0
    %222 = vmatprep.subr.mxu0 0.0
    %223 = vmatpush1.msra.mxu0 0.0
    %224 = vmatprep.subr.mxu0 0.0
    %225 = vmatpush1.msra.mxu0 0.0
    %226 = vmatprep.subr.mxu0 0.0
    %227 = vmatpush1.msra.mxu0 0.0
    %228 = vmatprep.subr.mxu0 0.0
    %229 = vmatpush1.msra.mxu0 0.0
    %230 = vmatprep.subr.mxu0 0.0
    %231 = vmatpush1.msra.mxu0 0.0
    %232 = vmatprep.subr.mxu0 0.0
    %233 = vmatpush1.msra.mxu0 0.0
    %234 = vmatprep.subr.mxu0 0.0
    %235 = vmatpush1.msra.mxu0 0.0
    %236 = vmatprep.subr.mxu0 0.0
    %237 = vmatpush1.msra.mxu0 0.0
    %238 = vmatprep.subr.mxu0 0.0
    %239 = vmatpush1.msra.mxu0 0.0
    %240 = vmatprep.subr.mxu0 0.0
    %241 = vmatpush1.msra.mxu0 0.0
    %242 = vmatprep.subr.mxu0 0.0
    %243 = vmatpush1.msra.mxu0 0.0
    %244 = vmatprep.subr.mxu0 0.0
    %245 = vmatpush1.msra.mxu0 0.0
    %246 = vmatprep.subr.mxu0 0.0
    %247 = vmatpush1.msra.mxu0 0.0
    %248 = vmatprep.subr.mxu0 0.0
    %249 = vmatpush1.msra.mxu0 0.0
    %250 = vmatprep.subr.mxu0 0.0
    %251 = vmatpush1.msra.mxu0 0.0
    %252 = vmatprep.subr.mxu0 0.0
    %253 = vmatpush1.msra.mxu0 0.0
    %254 = vmatprep.subr.mxu0 0.0
    %255 = vmatpush1.msra.mxu0 0.0
    %256 = vmatprep.mubr.f32.mxu0 0.0
    %257 = vmatmul.mubr.f32.gmra.mrb[0].mxu0 %v104
    %v258 = vpop.f32.mrb[0].mxu0
    %v259 = vadd.f32 0.0, %v258
    %v260 = vpop.f32.mrb[0].mxu0
    %261 = vmatprep.mubr.f32.mxu0 0.0
    %262 = vmatmul.mubr.f32.gmra.mrb[0].mxu0 %v107
    %v263 = vpop.f32.mrb[0].mxu0
    %v264 = vadd.f32 0.0, %v263
    %v265 = vpop.f32.mrb[0].mxu0
    %266 = vdwg.mxu0
    %v267 = vmul.f32 %v97, %v259
    %v268 = vmul.f32 %v98, %v264
    %v269 = vmul.f32 %v99, %v188
    %v270 = vmul.f32 %v100, %v189
    %v271 = vadd.f32 %v267, %v269
    %v272 = vadd.f32 %v268, %v270
    %v273 = vmul.f32 %v97, %v271
    %v274 = vmul.f32 %v98, %v272
    %275 = vmatprep.subr.mxu0 0.0
    %276 = vmatpush1.msra.mxu0 %v273
    %277 = vmatprep.subr.mxu0 0.0
    %278 = vmatpush1.msra.mxu0 %v274
    %279 = vmatprep.subr.mxu0 0.0
    %280 = vmatpush1.msra.mxu0 0.0
    %281 = vmatprep.subr.mxu0 0.0
    %282 = vmatpush1.msra.mxu0 0.0
    %283 = vmatprep.subr.mxu0 0.0
    %284 = vmatpush1.msra.mxu0 0.0
    %285 = vmatprep.subr.mxu0 0.0
    %286 = vmatpush1.msra.mxu0 0.0
    %287 = vmatprep.subr.mxu0 0.0
    %288 = vmatpush1.msra.mxu0 0.0
    %289 = vmatprep.subr.mxu0 0.0
    %290 = vmatpush1.msra.mxu0 0.0
    %291 = vmatprep.subr.mxu0 0.0
    %292 = vmatpush1.msra.mxu0 0.0
    %293 = vmatprep.subr.mxu0 0.0
    %294 = vmatpush1.msra.mxu0 0.0
    %295 = vmatprep.subr.mxu0 0.0
    %296 = vmatpush1.msra.mxu0 0.0
    %297 = vmatprep.subr.mxu0 0.0
    %298 = vmatpush1.msra.mxu0 0.0
    %299 = vmatprep.subr.mxu0 0.0
    %300 = vmatpush1.msra.mxu0 0.0
    %301 = vmatprep.subr.mxu0 0.0
    %302 = vmatpush1.msra.mxu0 0.0
    %303 = vmatprep.subr.mxu0 0.0
    %304 = vmatpush1.msra.mxu0 0.0
    %305 = vmatprep.subr.mxu0 0.0
    %306 = vmatpush1.msra.mxu0 0.0
    %307 = vmatprep.subr.mxu0 0.0
    %308 = vmatpush1.msra.mxu0 0.0
    %309 = vmatprep.subr.mxu0 0.0
    %310 = vmatpush1.msra.mxu0 0.0
    %311 = vmatprep.subr.mxu0 0.0
    %312 = vmatpush1.msra.mxu0 0.0
    %313 = vmatprep.subr.mxu0 0.0
    %314 = vmatpush1.msra.mxu0 0.0
    %315 = vmatprep.subr.mxu0 0.0
    %316 = vmatpush1.msra.mxu0 0.0
    %317 = vmatprep.subr.mxu0 0.0
    %318 = vmatpush1.msra.mxu0 0.0
    %319 = vmatprep.subr.mxu0 0.0
    %320 = vmatpush1.msra.mxu0 0.0
    %321 = vmatprep.subr.mxu0 0.0
    %322 = vmatpush1.msra.mxu0 0.0
    %323 = vmatprep.subr.mxu0 0.0
    %324 = vmatpush1.msra.mxu0 0.0
    %325 = vmatprep.subr.mxu0 0.0
    %326 = vmatpush1.msra.mxu0 0.0
    %327 = vmatprep.subr.mxu0 0.0
    %328 = vmatpush1.msra.mxu0 0.0
    %329 = vmatprep.subr.mxu0 0.0
    %330 = vmatpush1.msra.mxu0 0.0
    %331 = vmatprep.subr.mxu0 0.0
    %332 = vmatpush1.msra.mxu0 0.0
    %333 = vmatprep.subr.mxu0 0.0
    %334 = vmatpush1.msra.mxu0 0.0
    %335 = vmatprep.subr.mxu0 0.0
    %336 = vmatpush1.msra.mxu0 0.0
    %337 = vmatprep.subr.mxu0 0.0
    %338 = vmatpush1.msra.mxu0 0.0
    %339 = vmatprep.mubr.f32.mxu0 0.0
    %340 = vmatmul.mubr.f32.gmra.mrb[0].mxu0 %v104
    %v341 = vpop.f32.mrb[0].mxu0
    %v342 = vadd.f32 0.0, %v341
    %v343 = vpop.f32.mrb[0].mxu0
    %344 = vmatprep.mubr.f32.mxu0 0.0
    %345 = vmatmul.mubr.f32.gmra.mrb[0].mxu0 %v107
    %v346 = vpop.f32.mrb[0].mxu0
    %v347 = vadd.f32 0.0, %v346
    %v348 = vpop.f32.mrb[0].mxu0
    %349 = vdwg.mxu0
    %v350 = vmul.f32 %v97, %v342
    %v351 = vmul.f32 %v98, %v347
    %v352 = vmul.f32 %v99, %v271
    %v353 = vmul.f32 %v100, %v272
    %v354 = vadd.f32 %v350, %v352
    %v355 = vadd.f32 %v351, %v353
    %vm356 = vcmp.gt.f32.partialorder %v188, 0.0
    %vm357 = vcmp.gt.f32.partialorder %v189, 0.0
    %v358 = vmul.f32 %v188, 0.01
    %v359 = vmul.f32 %v189, 0.01
    %v360 = vsel %vm356, %v188, %v358
    %v361 = vsel %vm357, %v189, %v359
    %vm362 = vcmp.gt.f32.partialorder %v271, 0.0
    %vm363 = vcmp.gt.f32.partialorder %v272, 0.0
    %v364 = vmul.f32 %v271, 0.01
    %v365 = vmul.f32 %v272, 0.01
    %v366 = vsel %vm362, %v271, %v364
    %v367 = vsel %vm363, %v272, %v365
    %vm368 = vcmp.gt.f32.partialorder %v354, 0.0
    %vm369 = vcmp.gt.f32.partialorder %v355, 0.0
    %v370 = vmul.f32 %v354, 0.01
    %v371 = vmul.f32 %v355, 0.01
    %v372 = vsel %vm368, %v354, %v370
    %v373 = vsel %vm369, %v355, %v371
    %v374 = vmax.f32 %v86, 0.0
    %v375 = vmax.f32 %v87, 0.0
    %v376 = vlaneseq
    %v377 = vshrl.u32 %v376, 7
    %v378 = vsub.s32 0, %v377
    %v379 = vrot.slane %v82, %v378
    %v380 = vmul.f32 %v374, %v379
    %v381 = vmul.f32 %v375, %v379
    %vm382 = vcmask 261120
    %v383 = vsel %vm382, %v380, 0.0
    %384 = vadd.xlane.f32.xlu0 %v383
    %v385 = vpop.xlane.xlu0 %384
    %v386 = vsel %vm382, %v381, 0.0
    %387 = vadd.xlane.f32.xlu0 %v386
    %v388 = vpop.xlane.xlu0 %387
    %v389 = vmax.f32 %v360, 0.0
    %v390 = vmax.f32 %v361, 0.0
    %v391 = vlaneseq
    %v392 = vshrl.u32 %v391, 7
    %v393 = vsub.s32 0, %v392
    %v394 = vrot.slane %v83, %v393
    %v395 = vmul.f32 %v389, %v394
    %v396 = vmul.f32 %v390, %v394
    %v397 = vsel %vm382, %v395, 0.0
    %398 = vadd.xlane.f32.xlu0 %v397
    %v399 = vpop.xlane.xlu0 %398
    %v400 = vsel %vm382, %v396, 0.0
    %401 = vadd.xlane.f32.xlu0 %v400
    %v402 = vpop.xlane.xlu0 %401
    %v403 = vadd.f32 %v385, %v399
    %v404 = vadd.f32 %v388, %v402
    %v405 = vmax.f32 %v366, 0.0
    %v406 = vmax.f32 %v367, 0.0
    %v407 = vmul.f32 %v405, %v394
    %v408 = vmul.f32 %v406, %v394
    %v409 = vsel %vm382, %v407, 0.0
    %410 = vadd.xlane.f32.xlu0 %v409
    %v411 = vpop.xlane.xlu0 %410
    %v412 = vsel %vm382, %v408, 0.0
    %413 = vadd.xlane.f32.xlu0 %v412
    %v414 = vpop.xlane.xlu0 %413
    %v415 = vadd.f32 %v385, %v411
    %v416 = vadd.f32 %v388, %v414
    %v417 = vmax.f32 %v372, 0.0
    %v418 = vmax.f32 %v373, 0.0
    %v419 = vmul.f32 %v417, %v394
    %v420 = vmul.f32 %v418, %v394
    %v421 = vsel %vm382, %v419, 0.0
    %422 = vadd.xlane.f32.xlu0 %v421
    %v423 = vpop.xlane.xlu0 %422
    %v424 = vsel %vm382, %v420, 0.0
    %425 = vadd.xlane.f32.xlu0 %v424
    %v426 = vpop.xlane.xlu0 %425
    %v427 = vadd.f32 %v385, %v423
    %v428 = vadd.f32 %v388, %v426
    %v429 = vmax.f32 %v403, %v415
    %v430 = vmax.f32 %v404, %v416
    %v431 = vmax.f32 %v429, %v427
    %v432 = vmax.f32 %v430, %v428
    %v433 = vsub.f32 %v403, %v431
    %v434 = vsub.f32 %v404, %v432
    %v435 = vmul.f32 %v433, 1.442695
    %v436 = vpow.pop %v435
    %v437 = vmul.f32 %v434, 1.442695
    %v438 = vpow.pop %v437
    %v439 = vsub.f32 %v415, %v431
    %v440 = vsub.f32 %v416, %v432
    %v441 = vmul.f32 %v439, 1.442695
    %v442 = vpow.pop %v441
    %v443 = vmul.f32 %v440, 1.442695
    %v444 = vpow.pop %v443
    %v445 = vsub.f32 %v427, %v431
    %v446 = vsub.f32 %v428, %v432
    %v447 = vmul.f32 %v445, 1.442695
    %v448 = vpow.pop %v447
    %v449 = vmul.f32 %v446, 1.442695
    %v450 = vpow.pop %v449
    %v451 = vadd.f32 %v436, %v442
    %v452 = vadd.f32 %v438, %v444
    %v453 = vadd.f32 %v451, %v448
    %v454 = vadd.f32 %v452, %v450
    %v455 = vrcp.pop %v453
    %v456 = vmul.f32 1.0, %v455
    %v457 = vrcp.pop %v454
    %v458 = vmul.f32 1.0, %v457
    %v459 = vmul.f32 %v436, %v456
    %v460 = vmul.f32 %v438, %v458
    %v461 = vmul.f32 %v442, %v456
    %v462 = vmul.f32 %v444, %v458
    %v463 = vmul.f32 %v448, %v456
    %v464 = vmul.f32 %v450, %v458
    %s465 = scalar_lea.vmem [#allocation5], 16
    %v466 = vld [vmem:[%s465] sm:$0xff]
    %v467 = vld [vmem:[%s465 + $0x8] sm:$0xff]
    %s468 = scalar_lea.vmem [#allocation2], 16
    %v469 = vld [vmem:[%s468] sm:$0xff]
    %v470 = vld [vmem:[%s468 + $0x8] sm:$0xff]
    %v471 = vsel %vm88, %v466, 0.0
    %472 = vadd.xlane.f32.xlu0 %v471
    %v473 = vpop.xlane.xlu0 %472
    %v474 = vsel %vm88, %v467, 0.0
    %475 = vadd.xlane.f32.xlu0 %v474
    %v476 = vpop.xlane.xlu0 %475
    %v477 = vadd.f32 %v473, 1.0
    %v478 = vadd.f32 %v476, 1.0
    %v479 = vrsqrt.pop %v477
    %v480 = vrsqrt.pop %v478
    %v481 = vmul.f32 %v479, %v479
    %v482 = vmul.f32 %v480, %v480
    %v483 = vmul.f32 %v479, %v469
    %v484 = vmul.f32 %v480, %v470
    %v486 = vsel %vm88, %v466, 0
    %v489 = vsel %vm88, %v467, 0
    %491 = vmatprep.subr.mxu0 0.0
    %492 = vmatpush1.msra.mxu0 %v483
    %493 = vmatprep.subr.mxu0 0.0
    %494 = vmatpush1.msra.mxu0 %v484
    %495 = vmatprep.subr.mxu0 0.0
    %496 = vmatpush1.msra.mxu0 0.0
    %497 = vmatprep.subr.mxu0 0.0
    %498 = vmatpush1.msra.mxu0 0.0
    %499 = vmatprep.subr.mxu0 0.0
    %500 = vmatpush1.msra.mxu0 0.0
    %501 = vmatprep.subr.mxu0 0.0
    %502 = vmatpush1.msra.mxu0 0.0
    %503 = vmatprep.subr.mxu0 0.0
    %504 = vmatpush1.msra.mxu0 0.0
    %505 = vmatprep.subr.mxu0 0.0
    %506 = vmatpush1.msra.mxu0 0.0
    %507 = vmatprep.subr.mxu0 0.0
    %508 = vmatpush1.msra.mxu0 0.0
    %509 = vmatprep.subr.mxu0 0.0
    %510 = vmatpush1.msra.mxu0 0.0
    %511 = vmatprep.subr.mxu0 0.0
    %512 = vmatpush1.msra.mxu0 0.0
    %513 = vmatprep.subr.mxu0 0.0
    %514 = vmatpush1.msra.mxu0 0.0
    %515 = vmatprep.subr.mxu0 0.0
    %516 = vmatpush1.msra.mxu0 0.0
    %517 = vmatprep.subr.mxu0 0.0
    %518 = vmatpush1.msra.mxu0 0.0
    %519 = vmatprep.subr.mxu0 0.0
    %520 = vmatpush1.msra.mxu0 0.0
    %521 = vmatprep.subr.mxu0 0.0
    %522 = vmatpush1.msra.mxu0 0.0
    %523 = vmatprep.subr.mxu0 0.0
    %524 = vmatpush1.msra.mxu0 0.0
    %525 = vmatprep.subr.mxu0 0.0
    %526 = vmatpush1.msra.mxu0 0.0
    %527 = vmatprep.subr.mxu0 0.0
    %528 = vmatpush1.msra.mxu0 0.0
    %529 = vmatprep.subr.mxu0 0.0
    %530 = vmatpush1.msra.mxu0 0.0
    %531 = vmatprep.subr.mxu0 0.0
    %532 = vmatpush1.msra.mxu0 0.0
    %533 = vmatprep.subr.mxu0 0.0
    %534 = vmatpush1.msra.mxu0 0.0
    %535 = vmatprep.subr.mxu0 0.0
    %536 = vmatpush1.msra.mxu0 0.0
    %537 = vmatprep.subr.mxu0 0.0
    %538 = vmatpush1.msra.mxu0 0.0
    %539 = vmatprep.subr.mxu0 0.0
    %540 = vmatpush1.msra.mxu0 0.0
    %541 = vmatprep.subr.mxu0 0.0
    %542 = vmatpush1.msra.mxu0 0.0
    %543 = vmatprep.subr.mxu0 0.0
    %544 = vmatpush1.msra.mxu0 0.0
    %545 = vmatprep.subr.mxu0 0.0
    %546 = vmatpush1.msra.mxu0 0.0
    %547 = vmatprep.subr.mxu0 0.0
    %548 = vmatpush1.msra.mxu0 0.0
    %549 = vmatprep.subr.mxu0 0.0
    %550 = vmatpush1.msra.mxu0 0.0
    %551 = vmatprep.subr.mxu0 0.0
    %552 = vmatpush1.msra.mxu0 0.0
    %553 = vmatprep.subr.mxu0 0.0
    %554 = vmatpush1.msra.mxu0 0.0
    %555 = vmatprep.mubr.f32.mxu0 0.0
    %556 = vmatmul.mubr.f32.gmra.mrb[0].mxu0 %v486
    %v557 = vpop.f32.mrb[0].mxu0
    %v558 = vadd.f32 0.0, %v557
    %v559 = vpop.f32.mrb[0].mxu0
    %560 = vmatprep.mubr.f32.mxu0 0.0
    %561 = vmatmul.mubr.f32.gmra.mrb[0].mxu0 %v489
    %v562 = vpop.f32.mrb[0].mxu0
    %v563 = vadd.f32 0.0, %v562
    %v564 = vpop.f32.mrb[0].mxu0
    %565 = vdwg.mxu0
    %v566 = vmul.f32 %v479, %v558
    %v567 = vmul.f32 %v480, %v563
    %v568 = vmul.f32 %v481, %v469
    %v569 = vmul.f32 %v482, %v470
    %v570 = vadd.f32 %v566, %v568
    %v571 = vadd.f32 %v567, %v569
    %v572 = vmul.f32 %v479, %v570
    %v573 = vmul.f32 %v480, %v571
    %574 = vmatprep.subr.mxu0 0.0
    %575 = vmatpush1.msra.mxu0 %v572
    %576 = vmatprep.subr.mxu0 0.0
    %577 = vmatpush1.msra.mxu0 %v573
    %578 = vmatprep.subr.mxu0 0.0
    %579 = vmatpush1.msra.mxu0 0.0
    %580 = vmatprep.subr.mxu0 0.0
    %581 = vmatpush1.msra.mxu0 0.0
    %582 = vmatprep.subr.mxu0 0.0
    %583 = vmatpush1.msra.mxu0 0.0
    %584 = vmatprep.subr.mxu0 0.0
    %585 = vmatpush1.msra.mxu0 0.0
    %586 = vmatprep.subr.mxu0 0.0
    %587 = vmatpush1.msra.mxu0 0.0
    %588 = vmatprep.subr.mxu0 0.0
    %589 = vmatpush1.msra.mxu0 0.0
    %590 = vmatprep.subr.mxu0 0.0
    %591 = vmatpush1.msra.mxu0 0.0
    %592 = vmatprep.subr.mxu0 0.0
    %593 = vmatpush1.msra.mxu0 0.0
    %594 = vmatprep.subr.mxu0 0.0
    %595 = vmatpush1.msra.mxu0 0.0
    %596 = vmatprep.subr.mxu0 0.0
    %597 = vmatpush1.msra.mxu0 0.0
    %598 = vmatprep.subr.mxu0 0.0
    %599 = vmatpush1.msra.mxu0 0.0
    %600 = vmatprep.subr.mxu0 0.0
    %601 = vmatpush1.msra.mxu0 0.0
    %602 = vmatprep.subr.mxu0 0.0
    %603 = vmatpush1.msra.mxu0 0.0
    %604 = vmatprep.subr.mxu0 0.0
    %605 = vmatpush1.msra.mxu0 0.0
    %606 = vmatprep.subr.mxu0 0.0
    %607 = vmatpush1.msra.mxu0 0.0
    %608 = vmatprep.subr.mxu0 0.0
    %609 = vmatpush1.msra.mxu0 0.0
    %610 = vmatprep.subr.mxu0 0.0
    %611 = vmatpush1.msra.mxu0 0.0
    %612 = vmatprep.subr.mxu0 0.0
    %613 = vmatpush1.msra.mxu0 0.0
    %614 = vmatprep.subr.mxu0 0.0
    %615 = vmatpush1.msra.mxu0 0.0
    %616 = vmatprep.subr.mxu0 0.0
    %617 = vmatpush1.msra.mxu0 0.0
    %618 = vmatprep.subr.mxu0 0.0
    %619 = vmatpush1.msra.mxu0 0.0
    %620 = vmatprep.subr.mxu0 0.0
    %621 = vmatpush1.msra.mxu0 0.0
    %622 = vmatprep.subr.mxu0 0.0
    %623 = vmatpush1.msra.mxu0 0.0
    %624 = vmatprep.subr.mxu0 0.0
    %625 = vmatpush1.msra.mxu0 0.0
    %626 = vmatprep.subr.mxu0 0.0
    %627 = vmatpush1.msra.mxu0 0.0
    %628 = vmatprep.subr.mxu0 0.0
    %629 = vmatpush1.msra.mxu0 0.0
    %630 = vmatprep.subr.mxu0 0.0
    %631 = vmatpush1.msra.mxu0 0.0
    %632 = vmatprep.subr.mxu0 0.0
    %633 = vmatpush1.msra.mxu0 0.0
    %634 = vmatprep.subr.mxu0 0.0
    %635 = vmatpush1.msra.mxu0 0.0
    %636 = vmatprep.subr.mxu0 0.0
    %637 = vmatpush1.msra.mxu0 0.0
    %638 = vmatprep.mubr.f32.mxu0 0.0
    %639 = vmatmul.mubr.f32.gmra.mrb[0].mxu0 %v486
    %v640 = vpop.f32.mrb[0].mxu0
    %v641 = vadd.f32 0.0, %v640
    %v642 = vpop.f32.mrb[0].mxu0
    %643 = vmatprep.mubr.f32.mxu0 0.0
    %644 = vmatmul.mubr.f32.gmra.mrb[0].mxu0 %v489
    %v645 = vpop.f32.mrb[0].mxu0
    %v646 = vadd.f32 0.0, %v645
    %v647 = vpop.f32.mrb[0].mxu0
    %648 = vdwg.mxu0
    %v649 = vmul.f32 %v479, %v641
    %v650 = vmul.f32 %v480, %v646
    %v651 = vmul.f32 %v481, %v570
    %v652 = vmul.f32 %v482, %v571
    %v653 = vadd.f32 %v649, %v651
    %v654 = vadd.f32 %v650, %v652
    %v655 = vmul.f32 %v479, %v653
    %v656 = vmul.f32 %v480, %v654
    %657 = vmatprep.subr.mxu0 0.0
    %658 = vmatpush1.msra.mxu0 %v655
    %659 = vmatprep.subr.mxu0 0.0
    %660 = vmatpush1.msra.mxu0 %v656
    %661 = vmatprep.subr.mxu0 0.0
    %662 = vmatpush1.msra.mxu0 0.0
    %663 = vmatprep.subr.mxu0 0.0
    %664 = vmatpush1.msra.mxu0 0.0
    %665 = vmatprep.subr.mxu0 0.0
    %666 = vmatpush1.msra.mxu0 0.0
    %667 = vmatprep.subr.mxu0 0.0
    %668 = vmatpush1.msra.mxu0 0.0
    %669 = vmatprep.subr.mxu0 0.0
    %670 = vmatpush1.msra.mxu0 0.0
    %671 = vmatprep.subr.mxu0 0.0
    %672 = vmatpush1.msra.mxu0 0.0
    %673 = vmatprep.subr.mxu0 0.0
    %674 = vmatpush1.msra.mxu0 0.0
    %675 = vmatprep.subr.mxu0 0.0
    %676 = vmatpush1.msra.mxu0 0.0
    %677 = vmatprep.subr.mxu0 0.0
    %678 = vmatpush1.msra.mxu0 0.0
    %679 = vmatprep.subr.mxu0 0.0
    %680 = vmatpush1.msra.mxu0 0.0
    %681 = vmatprep.subr.mxu0 0.0
    %682 = vmatpush1.msra.mxu0 0.0
    %683 = vmatprep.subr.mxu0 0.0
    %684 = vmatpush1.msra.mxu0 0.0
    %685 = vmatprep.subr.mxu0 0.0
    %686 = vmatpush1.msra.mxu0 0.0
    %687 = vmatprep.subr.mxu0 0.0
    %688 = vmatpush1.msra.mxu0 0.0
    %689 = vmatprep.subr.mxu0 0.0
    %690 = vmatpush1.msra.mxu0 0.0
    %691 = vmatprep.subr.mxu0 0.0
    %692 = vmatpush1.msra.mxu0 0.0
    %693 = vmatprep.subr.mxu0 0.0
    %694 = vmatpush1.msra.mxu0 0.0
    %695 = vmatprep.subr.mxu0 0.0
    %696 = vmatpush1.msra.mxu0 0.0
    %697 = vmatprep.subr.mxu0 0.0
    %698 = vmatpush1.msra.mxu0 0.0
    %699 = vmatprep.subr.mxu0 0.0
    %700 = vmatpush1.msra.mxu0 0.0
    %701 = vmatprep.subr.mxu0 0.0
    %702 = vmatpush1.msra.mxu0 0.0
    %703 = vmatprep.subr.mxu0 0.0
    %704 = vmatpush1.msra.mxu0 0.0
    %705 = vmatprep.subr.mxu0 0.0
    %706 = vmatpush1.msra.mxu0 0.0
    %707 = vmatprep.subr.mxu0 0.0
    %708 = vmatpush1.msra.mxu0 0.0
    %709 = vmatprep.subr.mxu0 0.0
    %710 = vmatpush1.msra.mxu0 0.0
    %711 = vmatprep.subr.mxu0 0.0
    %712 = vmatpush1.msra.mxu0 0.0
    %713 = vmatprep.subr.mxu0 0.0
    %714 = vmatpush1.msra.mxu0 0.0
    %715 = vmatprep.subr.mxu0 0.0
    %716 = vmatpush1.msra.mxu0 0.0
    %717 = vmatprep.subr.mxu0 0.0
    %718 = vmatpush1.msra.mxu0 0.0
    %719 = vmatprep.subr.mxu0 0.0
    %720 = vmatpush1.msra.mxu0 0.0
    %721 = vmatprep.mubr.f32.mxu0 0.0
    %722 = vmatmul.mubr.f32.gmra.mrb[0].mxu0 %v486
    %v723 = vpop.f32.mrb[0].mxu0
    %v724 = vadd.f32 0.0, %v723
    %v725 = vpop.f32.mrb[0].mxu0
    %726 = vmatprep.mubr.f32.mxu0 0.0
    %727 = vmatmul.mubr.f32.gmra.mrb[0].mxu0 %v489
    %v728 = vpop.f32.mrb[0].mxu0
    %v729 = vadd.f32 0.0, %v728
    %v730 = vpop.f32.mrb[0].mxu0
    %731 = vdwg.mxu0
    %v732 = vmul.f32 %v479, %v724
    %v733 = vmul.f32 %v480, %v729
    %v734 = vmul.f32 %v481, %v653
    %v735 = vmul.f32 %v482, %v654
    %v736 = vadd.f32 %v732, %v734
    %v737 = vadd.f32 %v733, %v735
    %vm738 = vcmp.gt.f32.partialorder %v570, 0.0
    %vm739 = vcmp.gt.f32.partialorder %v571, 0.0
    %v740 = vmul.f32 %v570, 0.01
    %v741 = vmul.f32 %v571, 0.01
    %v742 = vsel %vm738, %v570, %v740
    %v743 = vsel %vm739, %v571, %v741
    %vm744 = vcmp.gt.f32.partialorder %v653, 0.0
    %vm745 = vcmp.gt.f32.partialorder %v654, 0.0
    %v746 = vmul.f32 %v653, 0.01
    %v747 = vmul.f32 %v654, 0.01
    %v748 = vsel %vm744, %v653, %v746
    %v749 = vsel %vm745, %v654, %v747
    %vm750 = vcmp.gt.f32.partialorder %v736, 0.0
    %vm751 = vcmp.gt.f32.partialorder %v737, 0.0
    %v752 = vmul.f32 %v736, 0.01
    %v753 = vmul.f32 %v737, 0.01
    %v754 = vsel %vm750, %v736, %v752
    %v755 = vsel %vm751, %v737, %v753
    %v756 = vmax.f32 %v469, 0.0
    %v757 = vmax.f32 %v470, 0.0
    %v758 = vmul.f32 %v756, %v379
    %v759 = vmul.f32 %v757, %v379
    %v760 = vsel %vm382, %v758, 0.0
    %761 = vadd.xlane.f32.xlu0 %v760
    %v762 = vpop.xlane.xlu0 %761
    %v763 = vsel %vm382, %v759, 0.0
    %764 = vadd.xlane.f32.xlu0 %v763
    %v765 = vpop.xlane.xlu0 %764
    %v766 = vmax.f32 %v742, 0.0
    %v767 = vmax.f32 %v743, 0.0
    %v768 = vmul.f32 %v766, %v394
    %v769 = vmul.f32 %v767, %v394
    %v770 = vsel %vm382, %v768, 0.0
    %771 = vadd.xlane.f32.xlu0 %v770
    %v772 = vpop.xlane.xlu0 %771
    %v773 = vsel %vm382, %v769, 0.0
    %774 = vadd.xlane.f32.xlu0 %v773
    %v775 = vpop.xlane.xlu0 %774
    %v776 = vadd.f32 %v762, %v772
    %v777 = vadd.f32 %v765, %v775
    %v778 = vmax.f32 %v748, 0.0
    %v779 = vmax.f32 %v749, 0.0
    %v780 = vmul.f32 %v778, %v394
    %v781 = vmul.f32 %v779, %v394
    %v782 = vsel %vm382, %v780, 0.0
    %783 = vadd.xlane.f32.xlu0 %v782
    %v784 = vpop.xlane.xlu0 %783
    %v785 = vsel %vm382, %v781, 0.0
    %786 = vadd.xlane.f32.xlu0 %v785
    %v787 = vpop.xlane.xlu0 %786
    %v788 = vadd.f32 %v762, %v784
    %v789 = vadd.f32 %v765, %v787
    %v790 = vmax.f32 %v754, 0.0
    %v791 = vmax.f32 %v755, 0.0
    %v792 = vmul.f32 %v790, %v394
    %v793 = vmul.f32 %v791, %v394
    %v794 = vsel %vm382, %v792, 0.0
    %795 = vadd.xlane.f32.xlu0 %v794
    %v796 = vpop.xlane.xlu0 %795
    %v797 = vsel %vm382, %v793, 0.0
    %798 = vadd.xlane.f32.xlu0 %v797
    %v799 = vpop.xlane.xlu0 %798
    %v800 = vadd.f32 %v762, %v796
    %v801 = vadd.f32 %v765, %v799
    %v802 = vmax.f32 %v776, %v788
    %v803 = vmax.f32 %v777, %v789
    %v804 = vmax.f32 %v802, %v800
    %v805 = vmax.f32 %v803, %v801
    %v806 = vsub.f32 %v776, %v804
    %v807 = vsub.f32 %v777, %v805
    %v808 = vmul.f32 %v806, 1.442695
    %v809 = vpow.pop %v808
    %v810 = vmul.f32 %v807, 1.442695
    %v811 = vpow.pop %v810
    %v812 = vsub.f32 %v788, %v804
    %v813 = vsub.f32 %v789, %v805
    %v814 = vmul.f32 %v812, 1.442695
    %v815 = vpow.pop %v814
    %v816 = vmul.f32 %v813, 1.442695
    %v817 = vpow.pop %v816
    %v818 = vsub.f32 %v800, %v804
    %v819 = vsub.f32 %v801, %v805
    %v820 = vmul.f32 %v818, 1.442695
    %v821 = vpow.pop %v820
    %v822 = vmul.f32 %v819, 1.442695
    %v823 = vpow.pop %v822
    %v824 = vadd.f32 %v809, %v815
    %v825 = vadd.f32 %v811, %v817
    %v826 = vadd.f32 %v824, %v821
    %v827 = vadd.f32 %v825, %v823
    %v828 = vrcp.pop %v826
    %v829 = vmul.f32 1.0, %v828
    %v830 = vrcp.pop %v827
    %v831 = vmul.f32 1.0, %v830
    %v832 = vmul.f32 %v809, %v829
    %v833 = vmul.f32 %v811, %v831
    %v834 = vmul.f32 %v815, %v829
    %v835 = vmul.f32 %v817, %v831
    %v836 = vmul.f32 %v821, %v829
    %v837 = vmul.f32 %v823, %v831
    %v838 = vmul.f32 %v459, %v360
    %v839 = vmul.f32 %v460, %v361
    %v840 = vmul.f32 %v461, %v742
    %v841 = vmul.f32 %v462, %v743
    %v842 = vadd.f32 %v838, %v840
    %v843 = vadd.f32 %v839, %v841
    %v844 = vmul.f32 %v463, %v366
    %v845 = vmul.f32 %v464, %v367
    %v846 = vadd.f32 %v842, %v844
    %v847 = vadd.f32 %v843, %v845
    %v848 = vmul.f32 %v846, 0.33333334
    %v849 = vmul.f32 %v847, 0.33333334
    %v850 = vmul.f32 %v832, %v748
    %v851 = vmul.f32 %v833, %v749
    %v852 = vmul.f32 %v834, %v372
    %v853 = vmul.f32 %v835, %v373
    %v854 = vadd.f32 %v850, %v852
    %v855 = vadd.f32 %v851, %v853
    %v856 = vmul.f32 %v836, %v754
    %v857 = vmul.f32 %v837, %v755
    %v858 = vadd.f32 %v854, %v856
    %v859 = vadd.f32 %v855, %v857
    %v860 = vmul.f32 %v858, 0.33333334
    %v861 = vmul.f32 %v859, 0.33333334
    %v862 = vld [vmem:[#allocation7] sm:$0xff]
    %v863 = vld [vmem:[#allocation7 + $0x8] sm:$0xff]
    %v864 = vld [vmem:[#allocation7 + $0x10] sm:$0xff]
    %v865 = vld [vmem:[#allocation7 + $0x18] sm:$0xff]
    %v866 = vld [vmem:[%s4] sm:$0x1]
    %v868 = vlaneseq
    %v869 = vshrl.u32 %v868, 7
    %v870 = vsub.s32 0, %v869
    %v871 = vrot.slane %v866, %v870
    %v874 = vsel %vm382, %v848, 0
    %v877 = vsel %vm382, %v849, 0
    %v880 = vsel %vm382, %v860, 0
    %v883 = vsel %vm382, %v861, 0
    %885 = vmatprep.subr.mxu0 0.0
    %886 = vmatpush1.msra.mxu0 %v862
    %887 = vmatprep.subr.mxu0 0.0
    %888 = vmatpush1.msra.mxu0 %v863
    %889 = vmatprep.subr.mxu0 0.0
    %890 = vmatpush1.msra.mxu0 %v864
    %891 = vmatprep.subr.mxu0 0.0
    %892 = vmatpush1.msra.mxu0 %v865
    %893 = vmatprep.subr.mxu0 0.0
    %894 = vmatpush1.msra.mxu0 0.0
    %895 = vmatprep.subr.mxu0 0.0
    %896 = vmatpush1.msra.mxu0 0.0
    %897 = vmatprep.subr.mxu0 0.0
    %898 = vmatpush1.msra.mxu0 0.0
    %899 = vmatprep.subr.mxu0 0.0
    %900 = vmatpush1.msra.mxu0 0.0
    %901 = vmatprep.subr.mxu0 0.0
    %902 = vmatpush1.msra.mxu0 0.0
    %903 = vmatprep.subr.mxu0 0.0
    %904 = vmatpush1.msra.mxu0 0.0
    %905 = vmatprep.subr.mxu0 0.0
    %906 = vmatpush1.msra.mxu0 0.0
    %907 = vmatprep.subr.mxu0 0.0
    %908 = vmatpush1.msra.mxu0 0.0
    %909 = vmatprep.subr.mxu0 0.0
    %910 = vmatpush1.msra.mxu0 0.0
    %911 = vmatprep.subr.mxu0 0.0
    %912 = vmatpush1.msra.mxu0 0.0
    %913 = vmatprep.subr.mxu0 0.0
    %914 = vmatpush1.msra.mxu0 0.0
    %915 = vmatprep.subr.mxu0 0.0
    %916 = vmatpush1.msra.mxu0 0.0
    %917 = vmatprep.subr.mxu0 0.0
    %918 = vmatpush1.msra.mxu0 0.0
    %919 = vmatprep.subr.mxu0 0.0
    %920 = vmatpush1.msra.mxu0 0.0
    %921 = vmatprep.subr.mxu0 0.0
    %922 = vmatpush1.msra.mxu0 0.0
    %923 = vmatprep.subr.mxu0 0.0
    %924 = vmatpush1.msra.mxu0 0.0
    %925 = vmatprep.subr.mxu0 0.0
    %926 = vmatpush1.msra.mxu0 0.0
    %927 = vmatprep.subr.mxu0 0.0
    %928 = vmatpush1.msra.mxu0 0.0
    %929 = vmatprep.subr.mxu0 0.0
    %930 = vmatpush1.msra.mxu0 0.0
    %931 = vmatprep.subr.mxu0 0.0
    %932 = vmatpush1.msra.mxu0 0.0
    %933 = vmatprep.subr.mxu0 0.0
    %934 = vmatpush1.msra.mxu0 0.0
    %935 = vmatprep.subr.mxu0 0.0
    %936 = vmatpush1.msra.mxu0 0.0
    %937 = vmatprep.subr.mxu0 0.0
    %938 = vmatpush1.msra.mxu0 0.0
    %939 = vmatprep.subr.mxu0 0.0
    %940 = vmatpush1.msra.mxu0 0.0
    %941 = vmatprep.subr.mxu0 0.0
    %942 = vmatpush1.msra.mxu0 0.0
    %943 = vmatprep.subr.mxu0 0.0
    %944 = vmatpush1.msra.mxu0 0.0
    %945 = vmatprep.subr.mxu0 0.0
    %946 = vmatpush1.msra.mxu0 0.0
    %947 = vmatprep.subr.mxu0 0.0
    %948 = vmatpush1.msra.mxu0 0.0
    %949 = vmatprep.mubr.f32.mxu0 0.0
    %950 = vmatmul.mubr.f32.gmra.mrb[0].mxu0 %v874
    %v951 = vpop.f32.mrb[0].mxu0
    %v952 = vadd.f32 %v871, %v951
    %v953 = vpop.f32.mrb[0].mxu0
    %954 = vmatprep.mubr.f32.mxu0 0.0
    %955 = vmatmul.mubr.f32.gmra.mrb[0].mxu0 %v877
    %v956 = vpop.f32.mrb[0].mxu0
    %v957 = vadd.f32 %v871, %v956
    %v958 = vpop.f32.mrb[0].mxu0
    %959 = vmatprep.mubr.f32.mxu0 0.0
    %960 = vmatmul.mubr.f32.gmra.mrb[0].mxu0 %v880
    %v961 = vpop.f32.mrb[0].mxu0
    %v962 = vadd.f32 %v871, %v961
    %v963 = vpop.f32.mrb[0].mxu0
    %964 = vmatprep.mubr.f32.mxu0 0.0
    %965 = vmatmul.mubr.f32.gmra.mrb[0].mxu0 %v883
    %v966 = vpop.f32.mrb[0].mxu0
    %v967 = vadd.f32 %v871, %v966
    %v968 = vpop.f32.mrb[0].mxu0
    %969 = vdwg.mxu0
    %vm970 = vcmp.gt.f32.partialorder %v952, 0.0
    %vm971 = vcmp.gt.f32.partialorder %v957, 0.0
    %vm972 = vcmp.gt.f32.partialorder %v962, 0.0
    %vm973 = vcmp.gt.f32.partialorder %v967, 0.0
    %v974 = vmul.f32 %v952, 0.01
    %v975 = vmul.f32 %v957, 0.01
    %v976 = vmul.f32 %v962, 0.01
    %v977 = vmul.f32 %v967, 0.01
    %v978 = vsel %vm970, %v952, %v974
    %v979 = vsel %vm971, %v957, %v975
    %v980 = vsel %vm972, %v962, %v976
    %v981 = vsel %vm973, %v967, %v977
    %v982 = vld [vmem:[#allocation8] sm:$0xff]
    %v983 = vld [vmem:[#allocation8 + $0x8] sm:$0xff]
    %v984 = vld [vmem:[#allocation8 + $0x10] sm:$0xff]
    %v985 = vld [vmem:[#allocation8 + $0x18] sm:$0xff]
    %v986 = vld [vmem:[%s6] sm:$0x1]
    %v988 = vlaneseq
    %v989 = vshrl.u32 %v988, 7
    %v990 = vsub.s32 0, %v989
    %v991 = vrot.slane %v986, %v990
    %v994 = vsel %vm382, %v978, 0
    %v997 = vsel %vm382, %v979, 0
    %v1000 = vsel %vm382, %v980, 0
    %v1003 = vsel %vm382, %v981, 0
    %1005 = vmatprep.subr.mxu0 0.0
    %1006 = vmatpush1.msra.mxu0 %v982
    %1007 = vmatprep.subr.mxu0 0.0
    %1008 = vmatpush1.msra.mxu0 %v983
    %1009 = vmatprep.subr.mxu0 0.0
    %1010 = vmatpush1.msra.mxu0 %v984
    %1011 = vmatprep.subr.mxu0 0.0
    %1012 = vmatpush1.msra.mxu0 %v985
    %1013 = vmatprep.subr.mxu0 0.0
    %1014 = vmatpush1.msra.mxu0 0.0
    %1015 = vmatprep.subr.mxu0 0.0
    %1016 = vmatpush1.msra.mxu0 0.0
    %1017 = vmatprep.subr.mxu0 0.0
    %1018 = vmatpush1.msra.mxu0 0.0
    %1019 = vmatprep.subr.mxu0 0.0
    %1020 = vmatpush1.msra.mxu0 0.0
    %1021 = vmatprep.subr.mxu0 0.0
    %1022 = vmatpush1.msra.mxu0 0.0
    %1023 = vmatprep.subr.mxu0 0.0
    %1024 = vmatpush1.msra.mxu0 0.0
    %1025 = vmatprep.subr.mxu0 0.0
    %1026 = vmatpush1.msra.mxu0 0.0
    %1027 = vmatprep.subr.mxu0 0.0
    %1028 = vmatpush1.msra.mxu0 0.0
    %1029 = vmatprep.subr.mxu0 0.0
    %1030 = vmatpush1.msra.mxu0 0.0
    %1031 = vmatprep.subr.mxu0 0.0
    %1032 = vmatpush1.msra.mxu0 0.0
    %1033 = vmatprep.subr.mxu0 0.0
    %1034 = vmatpush1.msra.mxu0 0.0
    %1035 = vmatprep.subr.mxu0 0.0
    %1036 = vmatpush1.msra.mxu0 0.0
    %1037 = vmatprep.subr.mxu0 0.0
    %1038 = vmatpush1.msra.mxu0 0.0
    %1039 = vmatprep.subr.mxu0 0.0
    %1040 = vmatpush1.msra.mxu0 0.0
    %1041 = vmatprep.subr.mxu0 0.0
    %1042 = vmatpush1.msra.mxu0 0.0
    %1043 = vmatprep.subr.mxu0 0.0
    %1044 = vmatpush1.msra.mxu0 0.0
    %1045 = vmatprep.subr.mxu0 0.0
    %1046 = vmatpush1.msra.mxu0 0.0
    %1047 = vmatprep.subr.mxu0 0.0
    %1048 = vmatpush1.msra.mxu0 0.0
    %1049 = vmatprep.subr.mxu0 0.0
    %1050 = vmatpush1.msra.mxu0 0.0
    %1051 = vmatprep.subr.mxu0 0.0
    %1052 = vmatpush1.msra.mxu0 0.0
    %1053 = vmatprep.subr.mxu0 0.0
    %1054 = vmatpush1.msra.mxu0 0.0
    %1055 = vmatprep.subr.mxu0 0.0
    %1056 = vmatpush1.msra.mxu0 0.0
    %1057 = vmatprep.subr.mxu0 0.0
    %1058 = vmatpush1.msra.mxu0 0.0
    %1059 = vmatprep.subr.mxu0 0.0
    %1060 = vmatpush1.msra.mxu0 0.0
    %1061 = vmatprep.subr.mxu0 0.0
    %1062 = vmatpush1.msra.mxu0 0.0
    %1063 = vmatprep.subr.mxu0 0.0
    %1064 = vmatpush1.msra.mxu0 0.0
    %1065 = vmatprep.subr.mxu0 0.0
    %1066 = vmatpush1.msra.mxu0 0.0
    %1067 = vmatprep.subr.mxu0 0.0
    %1068 = vmatpush1.msra.mxu0 0.0
    %1069 = vmatprep.mubr.f32.mxu0 0.0
    %1070 = vmatmul.mubr.f32.gmra.mrb[0].mxu0 %v994
    %v1071 = vpop.f32.mrb[0].mxu0
    %v1072 = vadd.f32 %v991, %v1071
    %v1073 = vpop.f32.mrb[0].mxu0
    %1074 = vmatprep.mubr.f32.mxu0 0.0
    %1075 = vmatmul.mubr.f32.gmra.mrb[0].mxu0 %v997
    %v1076 = vpop.f32.mrb[0].mxu0
    %v1077 = vadd.f32 %v991, %v1076
    %v1078 = vpop.f32.mrb[0].mxu0
    %1079 = vmatprep.mubr.f32.mxu0 0.0
    %1080 = vmatmul.mubr.f32.gmra.mrb[0].mxu0 %v1000
    %v1081 = vpop.f32.mrb[0].mxu0
    %v1082 = vadd.f32 %v991, %v1081
    %v1083 = vpop.f32.mrb[0].mxu0
    %1084 = vmatprep.mubr.f32.mxu0 0.0
    %1085 = vmatmul.mubr.f32.gmra.mrb[0].mxu0 %v1003
    %v1086 = vpop.f32.mrb[0].mxu0
    %v1087 = vadd.f32 %v991, %v1086
    %v1088 = vpop.f32.mrb[0].mxu0
    %1089 = vdwg.mxu0
    %vm1090 = vcmp.gt.f32.partialorder %v1072, 0.0
    %vm1091 = vcmp.gt.f32.partialorder %v1077, 0.0
    %vm1092 = vcmp.gt.f32.partialorder %v1082, 0.0
    %vm1093 = vcmp.gt.f32.partialorder %v1087, 0.0
    %v1094 = vmul.f32 %v1072, 0.01
    %v1095 = vmul.f32 %v1077, 0.01
    %v1096 = vmul.f32 %v1082, 0.01
    %v1097 = vmul.f32 %v1087, 0.01
    %v1098 = vsel %vm1090, %v1072, %v1094
    %v1099 = vsel %vm1091, %v1077, %v1095
    %v1100 = vsel %vm1092, %v1082, %v1096
    %v1101 = vsel %vm1093, %v1087, %v1097
    %1102 = vst.msk [vmem:[#allocation10] sm:$0xff] %vm382, %v1098
    %1103 = vst.msk [vmem:[#allocation10 + $0x8] sm:$0xff] %vm382, %v1099
    %s1104 = scalar_lea.vmem [#allocation10], 16
    %1105 = vst.msk [vmem:[%s1104] sm:$0xff] %vm382, %v1100
    %1106 = vst.msk [vmem:[%s1104 + $0x8] sm:$0xff] %vm382, %v1101
    // Predicated region
    $region46: #{tpu_custom_call.1} parent=1 // pred_check
      _
    $region47: #{tpu_custom_call.1} parent=1 // pred_check_branch
      %1108 = sbr.rel (0) target = $region49
    $region48: #{tpu_custom_call.1} parent=1 // pred_region
      %s1110 = ssub.s32 512, 512
      %1111 = vsyncadd [#allocation4], %s1110
      %s1112 = sshll.u32 [#allocation10], 4
      %s1113 = int_to_ptr.vmem [resolvable:$true] %s1112
      %1118 = dma.vmem_to_hbm [thread:$0]  %s1113, 512, %s7, [#allocation4], 128, 128, 8
    $region49: #{tpu_custom_call.1} parent=1 // pred_fallthru
      _
    // Predicated region
    $region50: #{tpu_custom_call.1} parent=1 // pred_check
      _
    $region51: #{tpu_custom_call.1} parent=1 // pred_check_branch
      %1120 = sbr.rel (0) target = $region53
    $region52: #{tpu_custom_call.1} parent=1 // pred_region
      %1121 = dma.done [#allocation4], 512
    $region53: #{tpu_custom_call.1} parent=1 // pred_fallthru
      _
    %1122 = vsyncpa [#allocation3], 1
    %1123 = vsyncpa [#allocation6], 1
    %1124 = vsyncpa [#allocation9], 1
    %1125 = vsyncpa [#allocation4], 1

</llo_original>
